<compile_context>
chip_gen: v7x
topology: tpu7x:2x2x1
jax: 0.10.0
libtpu: 0.0.40
codegen_flags: <defaults>
</compile_context>

<pallas_src>
import jax
import jax.numpy as jnp
import numpy as np
from jax import lax
from jax.experimental import pallas as pl
from jax.experimental.pallas import tpu as pltpu

K = 13
INPUT_CH = 1
HIDDEN_CH = 2
LATENT_CH = 4
H_IN = W_IN = 28                       # MNIST-sized input implied by two k=13 convs
H1 = W1 = H_IN - K + 1                 # 16
H2 = W2 = H1 - K + 1                   # 4
X_COLS = H_IN * W_IN                   # 784  (flattened input image)
H_COLS = HIDDEN_CH * H1 * W1           # 512  (col = co*256 + ho*16 + wo)
O_COLS = 2 * LATENT_CH * H2 * W2       # 128  (col = d*16 + ho*4 + wo; d = mu0..3,sig0..3)
BLOCK_B = 128                          # images per grid step (GEMM M dimension)


# ------------------------------ Pallas kernel --------------------------------
def _encoder_kernel(x_ref, t1_ref, b1_ref, t2_ref, b2_ref, o_ref):
    """B images: (B,784)@(784,512) -> bias+ReLU -> (B,512)@(512,128) -> bias."""
    h = jnp.dot(x_ref[...], t1_ref[...], preferred_element_type=jnp.float32)
    h = jnp.maximum(h + b1_ref[...], 0.0)                       # bias + ReLU
    o = jnp.dot(h, t2_ref[...], preferred_element_type=jnp.float32)
    o_ref[...] = o + b2_ref[...]                                # bias only (no act)


# ------------------------- host-side weight packing ---------------------------
def pack_encoder_params(params):
    """One-time prep (plain numpy, outside the jitted forward):
    pack each conv's weights into a full Toeplitz matrix so that
    conv(x) == x_flat @ T (valid conv, stride 1)."""
    w1 = np.asarray(params["w_conv"], np.float32)               # (2, 1, K, K)
    b1 = np.asarray(params["b_conv"], np.float32)               # (2,)
    w2 = np.concatenate([np.asarray(params["w_mu"], np.float32),
                         np.asarray(params["w_sigma"], np.float32)], axis=0)  # (8, 2, K, K)
    b2 = np.concatenate([np.asarray(params["b_mu"], np.float32),
                         np.asarray(params["b_sigma"], np.float32)], axis=0)  # (8,)

    # T1[(ho+kh)*28 + wo+kw, co*256 + ho*16 + wo] = w1[co, 0, kh, kw]
    t1 = np.zeros((X_COLS, H_COLS), np.float32)
    for co in range(HIDDEN_CH):
        for ho in range(H1):
            for wo in range(W1):
                col = co * (H1 * W1) + ho * W1 + wo
                for kh in range(K):
                    r = (ho + kh) * W_IN + wo
                    t1[r:r + K, col] = w1[co, 0, kh]
    b1_row = np.repeat(b1, H1 * W1)[None, :]                    # (1, 512)

    # T2[ci*256 + (ho+kh)*16 + wo+kw, d*16 + ho*4 + wo] = w2[d, ci, kh, kw]
    t2 = np.zeros((H_COLS, O_COLS), np.float32)
    for d in range(2 * LATENT_CH):
        for ho in range(H2):
            for wo in range(W2):
                col = d * (H2 * W2) + ho * W2 + wo
                for ci in range(HIDDEN_CH):
                    for kh in range(K):
                        r = ci * (H1 * W1) + (ho + kh) * W1 + wo
                        t2[r:r + K, col] = w2[d, ci, kh]
    b2_row = np.repeat(b2, H2 * W2)[None, :]                    # (1, 128)

    return {"t1": jnp.asarray(t1), "b1": jnp.asarray(b1_row),
            "t2": jnp.asarray(t2), "b2": jnp.asarray(b2_row)}


# --------------------------------- forward ------------------------------------
@jax.jit
def encoder_forward(x_nchw, packed):
    """x: (N, 1, 28, 28) f32 NCHW -> (mu, sigma) each (N, 4, 4, 4)."""
    N = x_nchw.shape[0]
    B = BLOCK_B
    n_pad = pl.cdiv(N, B) * B
    x_flat = x_nchw.reshape(N, X_COLS)
    if n_pad != N:                                              # zero-pad batch to a full block
        x_flat = jnp.pad(x_flat, ((0, n_pad - N), (0, 0)))

    out = pl.pallas_call(
        _encoder_kernel,
        out_shape=jax.ShapeDtypeStruct((n_pad, O_COLS), jnp.float32),
        grid_spec=pltpu.PrefetchScalarGridSpec(
            num_scalar_prefetch=0,
            grid=(n_pad // B,),
            in_specs=[
                pl.BlockSpec((B, X_COLS), lambda n: (n, 0)),        # input batch slab
                pl.BlockSpec((X_COLS, H_COLS), lambda n: (0, 0)),   # T1 (resident)
                pl.BlockSpec((1, H_COLS), lambda n: (0, 0)),        # b1
                pl.BlockSpec((H_COLS, O_COLS), lambda n: (0, 0)),   # T2 (resident)
                pl.BlockSpec((1, O_COLS), lambda n: (0, 0)),        # b2
            ],
            out_specs=pl.BlockSpec((B, O_COLS), lambda n: (n, 0)),  # 128-lane dense
        ),
        compiler_params=pltpu.CompilerParams(
            dimension_semantics=("parallel",)),
    )(x_flat, packed["t1"], packed["b1"], packed["t2"], packed["b2"])

    # out[n, d*16 + ho*4 + wo] -> (n, d, ho, wo); d = [mu0..3, sigma0..3]
    out = out[:N].reshape(N, 2 * LATENT_CH, H2, W2)
    return out[:, :LATENT_CH], out[:, LATENT_CH:]


# ----------------------- independent pure-JAX reference -----------------------
def _reference_conv2d(x, w, b):
    y = lax.conv_general_dilated(
        x, w, window_strides=(1, 1), padding="VALID",
        dimension_numbers=("NCHW", "OIHW", "NCHW"),
        precision=lax.Precision.HIGHEST)
    return y + b[None, :, None, None]


def _reference_encoder(x, params):
    h = jnp.maximum(_reference_conv2d(x, params["w_conv"], params["b_conv"]), 0.0)
    mu = _reference_conv2d(h, params["w_mu"], params["b_mu"])
    sigma = _reference_conv2d(h, params["w_sigma"], params["b_sigma"])
    return mu, sigma


if __name__ == "__main__":
    key = jax.random.PRNGKey(0)
    k1, k2, k3, k4, k5, k6, kx = jax.random.split(key, 7)
    # Deterministic synthetic parameters (shapes from the module __init__).
    params = {
        "w_conv": jax.random.normal(k1, (HIDDEN_CH, INPUT_CH, K, K), jnp.float32) * 0.05,
        "b_conv": jax.random.normal(k2, (HIDDEN_CH,), jnp.float32) * 0.05,
        "w_mu": jax.random.normal(k3, (LATENT_CH, HIDDEN_CH, K, K), jnp.float32) * 0.05,
        "b_mu": jax.random.normal(k4, (LATENT_CH,), jnp.float32) * 0.05,
        "w_sigma": jax.random.normal(k5, (LATENT_CH, HIDDEN_CH, K, K), jnp.float32) * 0.05,
        "b_sigma": jax.random.normal(k6, (LATENT_CH,), jnp.float32) * 0.05,
    }
    # Input image batch: 28x28 -> conv(k=13) -> 16x16 -> conv(k=13) -> 4x4.
    x = jax.random.normal(kx, (2, INPUT_CH, H_IN, W_IN), jnp.float32)

    packed = pack_encoder_params(params)          # one-time host-side weight prep
    mu, sigma = encoder_forward(x, packed)
    mu = jax.block_until_ready(mu)
    sigma = jax.block_until_ready(sigma)

    mu_ref, sigma_ref = _reference_encoder(x, params)
    mu_ref = jax.block_until_ready(mu_ref)
    sigma_ref = jax.block_until_ready(sigma_ref)

    assert mu.shape == (2, LATENT_CH, H2, W2), mu.shape
    assert sigma.shape == (2, LATENT_CH, H2, W2), sigma.shape
    np.testing.assert_allclose(np.asarray(mu), np.asarray(mu_ref), rtol=1e-4, atol=1e-4)
    np.testing.assert_allclose(np.asarray(sigma), np.asarray(sigma_ref), rtol=1e-4, atol=1e-4)
    print("KERNEL_OK")
</pallas_src>

<mosaic_0001>
module attributes {stable_mosaic.version = 11 : i64} {
  func.func @_encoder_kernel(%arg0: i32, %arg1: memref<128x784xf32, #tpu.memory_space<vmem>>, %arg2: memref<784x512xf32, #tpu.memory_space<vmem>>, %arg3: memref<1x512xf32, #tpu.memory_space<vmem>>, %arg4: memref<512x128xf32, #tpu.memory_space<vmem>>, %arg5: memref<1x128xf32, #tpu.memory_space<vmem>>, %arg6: memref<128x128xf32, #tpu.memory_space<vmem>>) attributes {dimension_semantics = [#tpu.dimension_semantics<parallel>], iteration_bounds = array<i64: 1>, scalar_prefetch = 0 : i64, scratch_operands = 0 : i64, tpu.core_type = #tpu.core_type<tc>, window_params = [{transform_indices = @transform_0, window_bounds = array<i64: 128, 784>}, {pipeline_mode = #tpu.pipeline_mode<synchronous>, transform_indices = @transform_1, window_bounds = array<i64: 784, 512>}, {pipeline_mode = #tpu.pipeline_mode<synchronous>, transform_indices = @transform_2, window_bounds = array<i64: 1, 512>}, {pipeline_mode = #tpu.pipeline_mode<synchronous>, transform_indices = @transform_3, window_bounds = array<i64: 512, 128>}, {pipeline_mode = #tpu.pipeline_mode<synchronous>, transform_indices = @transform_4, window_bounds = array<i64: 1, 128>}, {transform_indices = @transform_5, window_bounds = array<i64: 128, 128>}]} {
    %c0 = arith.constant 0 : index
    %c0_0 = arith.constant 0 : index
    %0 = vector.load %arg1[%c0, %c0_0] : memref<128x784xf32, #tpu.memory_space<vmem>>, vector<128x784xf32>
    %c0_1 = arith.constant 0 : index
    %c0_2 = arith.constant 0 : index
    %1 = vector.load %arg2[%c0_1, %c0_2] : memref<784x512xf32, #tpu.memory_space<vmem>>, vector<784x512xf32>
    %cst = arith.constant dense<0.000000e+00> : vector<128x512xf32>
    %2 = tpu.matmul %0, %1, %cst {dimension_numbers = #tpu.dot_dimension_numbers<[1], [0], [0], [1], [0, 0, 1, 1], [], []>} : vector<128x784xf32>, vector<784x512xf32>, vector<128x512xf32> -> vector<128x512xf32>
    %c0_3 = arith.constant 0 : index
    %c0_4 = arith.constant 0 : index
    %3 = vector.load %arg3[%c0_3, %c0_4] : memref<1x512xf32, #tpu.memory_space<vmem>>, vector<1x512xf32>
    %4 = vector.broadcast %3 : vector<1x512xf32> to vector<128x512xf32>
    %5 = arith.addf %2, %4 : vector<128x512xf32>
    %cst_5 = arith.constant 0.000000e+00 : f32
    %6 = vector.broadcast %cst_5 : f32 to vector<128x512xf32>
    %7 = arith.maximumf %5, %6 : vector<128x512xf32>
    %c0_6 = arith.constant 0 : index
    %c0_7 = arith.constant 0 : index
    %8 = vector.load %arg4[%c0_6, %c0_7] : memref<512x128xf32, #tpu.memory_space<vmem>>, vector<512x128xf32>
    %cst_8 = arith.constant dense<0.000000e+00> : vector<128x128xf32>
    %9 = tpu.matmul %7, %8, %cst_8 {dimension_numbers = #tpu.dot_dimension_numbers<[1], [0], [0], [1], [0, 0, 1, 1], [], []>} : vector<128x512xf32>, vector<512x128xf32>, vector<128x128xf32> -> vector<128x128xf32>
    %c0_9 = arith.constant 0 : index
    %c0_10 = arith.constant 0 : index
    %10 = vector.load %arg5[%c0_9, %c0_10] : memref<1x128xf32, #tpu.memory_space<vmem>>, vector<1x128xf32>
    %11 = vector.broadcast %10 : vector<1x128xf32> to vector<128x128xf32>
    %12 = arith.addf %9, %11 : vector<128x128xf32>
    %c0_11 = arith.constant 0 : index
    %c0_12 = arith.constant 0 : index
    %13 = vector.load %arg6[%c0_11, %c0_12] : memref<128x128xf32, #tpu.memory_space<vmem>>, vector<128x128xf32>
    tpu.vector_store %arg6[%c0_11, %c0_12], %12 {strides = array<i32>} : memref<128x128xf32, #tpu.memory_space<vmem>>, vector<128x128xf32>,
    return
  }
  func.func @transform_0(%arg0: i32) -> (i32, i32) {
    %c0_i32 = arith.constant 0 : i32
    %c0_i32_0 = arith.constant 0 : i32
    return %arg0, %c0_i32 : i32, i32
  }
  func.func @transform_1(%arg0: i32) -> (i32, i32) {
    %c0_i32 = arith.constant 0 : i32
    %c0_i32_0 = arith.constant 0 : i32
    %c0_i32_1 = arith.constant 0 : i32
    return %c0_i32, %c0_i32_0 : i32, i32
  }
  func.func @transform_2(%arg0: i32) -> (i32, i32) {
    %c0_i32 = arith.constant 0 : i32
    %c0_i32_0 = arith.constant 0 : i32
    %c0_i32_1 = arith.constant 0 : i32
    return %c0_i32, %c0_i32_0 : i32, i32
  }
  func.func @transform_3(%arg0: i32) -> (i32, i32) {
    %c0_i32 = arith.constant 0 : i32
    %c0_i32_0 = arith.constant 0 : i32
    %c0_i32_1 = arith.constant 0 : i32
    return %c0_i32, %c0_i32_0 : i32, i32
  }
  func.func @transform_4(%arg0: i32) -> (i32, i32) {
    %c0_i32 = arith.constant 0 : i32
    %c0_i32_0 = arith.constant 0 : i32
    %c0_i32_1 = arith.constant 0 : i32
    return %c0_i32, %c0_i32_0 : i32, i32
  }
  func.func @transform_5(%arg0: i32) -> (i32, i32) {
    %c0_i32 = arith.constant 0 : i32
    %c0_i32_0 = arith.constant 0 : i32
    return %arg0, %c0_i32 : i32, i32
  }
}

</mosaic_0001>

<llo_original>
// kernel: encoder_forward.1
$region0: #{encoder_forward.1}
  #allocation0 [shape = 'u32[]', space=smem, size = 0x4, offset = 0x4, fixed_abs, tag = 'smem constant byte address 0x4 - core index']
  #allocation1 [shape = 'u32[144,128]{1,0:T(1,128)}', space=vmem, size = 0x12000, scoped, tag = 'internal scratch']
  %s0 = inlined_call_operand.vmem [shape: f32[128,784], index: 0, kind: input, shape index: {}]
  %s1 = inlined_call_operand.hbm [shape: f32[784,512], index: 1, kind: input, shape index: {}]
  %s2 = inlined_call_operand.hbm [shape: f32[1,512], index: 2, kind: input, shape index: {}]
  %s3 = inlined_call_operand.hbm [shape: f32[512,128], index: 3, kind: input, shape index: {}]
  %s4 = inlined_call_operand.hbm [shape: f32[1,128], index: 4, kind: input, shape index: {}]
  %s5 = inlined_call_operand.vmem [shape: f32[128,128], index: 5, kind: output, shape index: {}]
  %s6 = sld [smem:[#allocation0]]
  $region46: #{encoder_forward.1} parent=0
    _
  %s8 = ssub.s32 1, %s6
  %s9 = scalar_select 0, %s8, %s6
  $region1: #{encoder_forward.1} parent=0
    #allocation2 [shape = 'u8[1605632]{0}', space=vmem, size = 0x188000, scoped, tag = 'input window, operand 1, single buffered']
    #allocation3 [shape = 's32[1]{0}', space=sflag, size = 0x4, scoped, tag = 'scoped memory for encoder_forward.1']
    #allocation4 [shape = 'u8[2048]{0}', space=vmem, size = 0x800, scoped, tag = 'input window, operand 2, single buffered']
    #allocation5 [shape = 's32[1]{0}', space=sflag, size = 0x4, scoped, tag = 'scoped memory for encoder_forward.1']
    #allocation6 [shape = 'u8[262144]{0}', space=vmem, size = 0x40000, scoped, tag = 'input window, operand 3, single buffered']
    #allocation7 [shape = 'u8[512]{0}', space=vmem, size = 0x400, scoped, tag = 'input window, operand 4, single buffered']
    #allocation8 [shape = 's32[1]{0}', space=sflag, size = 0x4, scoped, tag = 'scoped memory for encoder_forward.1']
    %10 = vsyncpa [#allocation3], 0
    %11 = vsyncpa [#allocation5], 0
    %12 = vsyncpa [#allocation8], 0
    // Predicated region
    $region2: #{encoder_forward.1} parent=1 // pred_check
      _
    $region3: #{encoder_forward.1} parent=1 // pred_check_branch
      %14 = sbr.rel (0) target = $region5
    $region4: #{encoder_forward.1} parent=1 // pred_region
      _
    $region5: #{encoder_forward.1} parent=1 // pred_fallthru
      _
    // Predicated region
    $region6: #{encoder_forward.1} parent=1 // pred_check
      _
    $region7: #{encoder_forward.1} parent=1 // pred_check_branch
      %16 = sbr.rel (0) target = $region9
    $region8: #{encoder_forward.1} parent=1 // pred_region
      %s18 = ssub.s32 50176, 50176
      %19 = vsyncadd [#allocation3], %s18
      %s20 = sshll.u32 [#allocation2], 4
      %s21 = int_to_ptr.vmem [resolvable:$true] %s20
      %26 = dma.hbm_to_vmem [thread:$0]  %s1, 50176, %s21, [#allocation3], 512, 512, 32
    $region9: #{encoder_forward.1} parent=1 // pred_fallthru
      _
    // Predicated region
    $region10: #{encoder_forward.1} parent=1 // pred_check
      _
    $region11: #{encoder_forward.1} parent=1 // pred_check_branch
      %28 = sbr.rel (0) target = $region13
    $region12: #{encoder_forward.1} parent=1 // pred_region
      %s30 = ssub.s32 64, 64
      %31 = vsyncadd [#allocation5], %s30
      %s33 = sshll.u32 [#allocation4], 4
      %s34 = int_to_ptr.vmem [resolvable:$true] %s33
      %36 = dma.hbm_to_vmem [thread:$0]  %s2, 64, %s34, [#allocation5]
    $region13: #{encoder_forward.1} parent=1 // pred_fallthru
      _
    // Predicated region
    $region14: #{encoder_forward.1} parent=1 // pred_check
      _
    $region15: #{encoder_forward.1} parent=1 // pred_check_branch
      %38 = sbr.rel (0) target = $region17
    $region16: #{encoder_forward.1} parent=1 // pred_region
      %s40 = ssub.s32 8192, 8192
      %41 = vsyncadd [#allocation5], %s40
      %s42 = sshll.u32 [#allocation6], 4
      %s43 = int_to_ptr.vmem [resolvable:$true] %s42
      %48 = dma.hbm_to_vmem [thread:$0]  %s3, 8192, %s43, [#allocation5], 128, 128, 8
    $region17: #{encoder_forward.1} parent=1 // pred_fallthru
      _
    // Predicated region
    $region18: #{encoder_forward.1} parent=1 // pred_check
      _
    $region19: #{encoder_forward.1} parent=1 // pred_check_branch
      %50 = sbr.rel (0) target = $region21
    $region20: #{encoder_forward.1} parent=1 // pred_region
      %s52 = ssub.s32 16, 16
      %53 = vsyncadd [#allocation8], %s52
      %s55 = sshll.u32 [#allocation7], 4
      %s56 = int_to_ptr.vmem [resolvable:$true] %s55
      %58 = dma.hbm_to_vmem [thread:$0]  %s4, 16, %s56, [#allocation8]
    $region21: #{encoder_forward.1} parent=1 // pred_fallthru
      _
    // Predicated region
    $region22: #{encoder_forward.1} parent=1 // pred_check
      _
    $region23: #{encoder_forward.1} parent=1 // pred_check_branch
      %60 = sbr.rel (0) target = $region25
    $region24: #{encoder_forward.1} parent=1 // pred_region
      %61 = dma.done [#allocation3], 50176
    $region25: #{encoder_forward.1} parent=1 // pred_fallthru
      _
    // Predicated region
    $region26: #{encoder_forward.1} parent=1 // pred_check
      _
    $region27: #{encoder_forward.1} parent=1 // pred_check_branch
      %63 = sbr.rel (0) target = $region29
    $region28: #{encoder_forward.1} parent=1 // pred_region
      %64 = dma.done [#allocation5], 64
    $region29: #{encoder_forward.1} parent=1 // pred_fallthru
      _
    // Predicated region
    $region30: #{encoder_forward.1} parent=1 // pred_check
      _
    $region31: #{encoder_forward.1} parent=1 // pred_check_branch
      %66 = sbr.rel (0) target = $region33
    $region32: #{encoder_forward.1} parent=1 // pred_region
      %67 = dma.done [#allocation5], 8192
    $region33: #{encoder_forward.1} parent=1 // pred_fallthru
      _
    // Predicated region
    $region34: #{encoder_forward.1} parent=1 // pred_check
      _
    $region35: #{encoder_forward.1} parent=1 // pred_check_branch
      %69 = sbr.rel (0) target = $region37
    $region36: #{encoder_forward.1} parent=1 // pred_region
      %70 = dma.done [#allocation8], 16
    $region37: #{encoder_forward.1} parent=1 // pred_fallthru
      _
    %v71 = vld [vmem:[%s0] sm:$0xff]
    %v72 = vld [vmem:[%s0 + $0x8] sm:$0xff]
    %v73 = vld [vmem:[%s0 + $0x10] sm:$0xff]
    %v74 = vld [vmem:[%s0 + $0x18] sm:$0xff]
    %v75 = vld [vmem:[%s0 + $0x20] sm:$0xff]
    %v76 = vld [vmem:[%s0 + $0x28] sm:$0xff]
    %v77 = vld [vmem:[%s0 + $0x30] sm:$0xff]
    %v78 = vld [vmem:[%s0 + $0x38] sm:$0xff]
    %v79 = vld [vmem:[%s0 + $0x40] sm:$0xff]
    %v80 = vld [vmem:[%s0 + $0x48] sm:$0xff]
    %v81 = vld [vmem:[%s0 + $0x50] sm:$0xff]
    %v82 = vld [vmem:[%s0 + $0x58] sm:$0xff]
    %v83 = vld [vmem:[%s0 + $0x60] sm:$0xff]
    %v84 = vld [vmem:[%s0 + $0x68] sm:$0xff]
    %v85 = vld [vmem:[%s0 + $0x70] sm:$0xff]
    %v86 = vld [vmem:[%s0 + $0x78] sm:$0xff]
    %v87 = vld [vmem:[%s0 + $0x80] sm:$0xff]
    %v88 = vld [vmem:[%s0 + $0x88] sm:$0xff]
    %v89 = vld [vmem:[%s0 + $0x90] sm:$0xff]
    %v90 = vld [vmem:[%s0 + $0x98] sm:$0xff]
    %v91 = vld [vmem:[%s0 + $0xa0] sm:$0xff]
    %v92 = vld [vmem:[%s0 + $0xa8] sm:$0xff]
    %v93 = vld [vmem:[%s0 + $0xb0] sm:$0xff]
    %v94 = vld [vmem:[%s0 + $0xb8] sm:$0xff]
    %v95 = vld [vmem:[%s0 + $0xc0] sm:$0xff]
    %v96 = vld [vmem:[%s0 + $0xc8] sm:$0xff]
    %v97 = vld [vmem:[%s0 + $0xd0] sm:$0xff]
    %v98 = vld [vmem:[%s0 + $0xd8] sm:$0xff]
    %v99 = vld [vmem:[%s0 + $0xe0] sm:$0xff]
    %v100 = vld [vmem:[%s0 + $0xe8] sm:$0xff]
    %v101 = vld [vmem:[%s0 + $0xf0] sm:$0xff]
    %v102 = vld [vmem:[%s0 + $0xf8] sm:$0xff]
    %v103 = vld [vmem:[%s0 + $0x100] sm:$0xff]
    %v104 = vld [vmem:[%s0 + $0x108] sm:$0xff]
    %v105 = vld [vmem:[%s0 + $0x110] sm:$0xff]
    %v106 = vld [vmem:[%s0 + $0x118] sm:$0xff]
    %v107 = vld [vmem:[%s0 + $0x120] sm:$0xff]
    %v108 = vld [vmem:[%s0 + $0x128] sm:$0xff]
    %v109 = vld [vmem:[%s0 + $0x130] sm:$0xff]
    %v110 = vld [vmem:[%s0 + $0x138] sm:$0xff]
    %v111 = vld [vmem:[%s0 + $0x140] sm:$0xff]
    %v112 = vld [vmem:[%s0 + $0x148] sm:$0xff]
    %v113 = vld [vmem:[%s0 + $0x150] sm:$0xff]
    %v114 = vld [vmem:[%s0 + $0x158] sm:$0xff]
    %v115 = vld [vmem:[%s0 + $0x160] sm:$0xff]
    %v116 = vld [vmem:[%s0 + $0x168] sm:$0xff]
    %v117 = vld [vmem:[%s0 + $0x170] sm:$0xff]
    %v118 = vld [vmem:[%s0 + $0x178] sm:$0xff]
    %v119 = vld [vmem:[%s0 + $0x180] sm:$0xff]
    %v120 = vld [vmem:[%s0 + $0x188] sm:$0xff]
    %v121 = vld [vmem:[%s0 + $0x190] sm:$0xff]
    %v122 = vld [vmem:[%s0 + $0x198] sm:$0xff]
    %v123 = vld [vmem:[%s0 + $0x1a0] sm:$0xff]
    %v124 = vld [vmem:[%s0 + $0x1a8] sm:$0xff]
    %v125 = vld [vmem:[%s0 + $0x1b0] sm:$0xff]
    %v126 = vld [vmem:[%s0 + $0x1b8] sm:$0xff]
    %v127 = vld [vmem:[%s0 + $0x1c0] sm:$0xff]
    %v128 = vld [vmem:[%s0 + $0x1c8] sm:$0xff]
    %v129 = vld [vmem:[%s0 + $0x1d0] sm:$0xff]
    %v130 = vld [vmem:[%s0 + $0x1d8] sm:$0xff]
    %v131 = vld [vmem:[%s0 + $0x1e0] sm:$0xff]
    %v132 = vld [vmem:[%s0 + $0x1e8] sm:$0xff]
    %v133 = vld [vmem:[%s0 + $0x1f0] sm:$0xff]
    %v134 = vld [vmem:[%s0 + $0x1f8] sm:$0xff]
    %v135 = vld [vmem:[%s0 + $0x200] sm:$0xff]
    %v136 = vld [vmem:[%s0 + $0x208] sm:$0xff]
    %v137 = vld [vmem:[%s0 + $0x210] sm:$0xff]
    %v138 = vld [vmem:[%s0 + $0x218] sm:$0xff]
    %v139 = vld [vmem:[%s0 + $0x220] sm:$0xff]
    %v140 = vld [vmem:[%s0 + $0x228] sm:$0xff]
    %v141 = vld [vmem:[%s0 + $0x230] sm:$0xff]
    %v142 = vld [vmem:[%s0 + $0x238] sm:$0xff]
    %v143 = vld [vmem:[%s0 + $0x240] sm:$0xff]
    %v144 = vld [vmem:[%s0 + $0x248] sm:$0xff]
    %v145 = vld [vmem:[%s0 + $0x250] sm:$0xff]
    %v146 = vld [vmem:[%s0 + $0x258] sm:$0xff]
    %v147 = vld [vmem:[%s0 + $0x260] sm:$0xff]
    %v148 = vld [vmem:[%s0 + $0x268] sm:$0xff]
    %v149 = vld [vmem:[%s0 + $0x270] sm:$0xff]
    %v150 = vld [vmem:[%s0 + $0x278] sm:$0xff]
    %v151 = vld [vmem:[%s0 + $0x280] sm:$0xff]
    %v152 = vld [vmem:[%s0 + $0x288] sm:$0xff]
    %v153 = vld [vmem:[%s0 + $0x290] sm:$0xff]
    %v154 = vld [vmem:[%s0 + $0x298] sm:$0xff]
    %v155 = vld [vmem:[%s0 + $0x2a0] sm:$0xff]
    %v156 = vld [vmem:[%s0 + $0x2a8] sm:$0xff]
    %v157 = vld [vmem:[%s0 + $0x2b0] sm:$0xff]
    %v158 = vld [vmem:[%s0 + $0x2b8] sm:$0xff]
    %v159 = vld [vmem:[%s0 + $0x2c0] sm:$0xff]
    %v160 = vld [vmem:[%s0 + $0x2c8] sm:$0xff]
    %v161 = vld [vmem:[%s0 + $0x2d0] sm:$0xff]
    %v162 = vld [vmem:[%s0 + $0x2d8] sm:$0xff]
    %v163 = vld [vmem:[%s0 + $0x2e0] sm:$0xff]
    %v164 = vld [vmem:[%s0 + $0x2e8] sm:$0xff]
    %v165 = vld [vmem:[%s0 + $0x2f0] sm:$0xff]
    %v166 = vld [vmem:[%s0 + $0x2f8] sm:$0xff]
    %v167 = vld [vmem:[%s0 + $0x300] sm:$0xff]
    %v168 = vld [vmem:[%s0 + $0x308] sm:$0xff]
    %v169 = vld [vmem:[%s0 + $0x310] sm:$0xff]
    %v170 = vld [vmem:[%s0 + $0x318] sm:$0xff]
    %v171 = vld [vmem:[%s0 + $0x320] sm:$0xff]
    %v172 = vld [vmem:[%s0 + $0x328] sm:$0xff]
    %v173 = vld [vmem:[%s0 + $0x330] sm:$0xff]
    %v174 = vld [vmem:[%s0 + $0x338] sm:$0xff]
    %v175 = vld [vmem:[%s0 + $0x340] sm:$0xff]
    %v176 = vld [vmem:[%s0 + $0x348] sm:$0xff]
    %v177 = vld [vmem:[%s0 + $0x350] sm:$0xff]
    %v178 = vld [vmem:[%s0 + $0x358] sm:$0xff]
    %v179 = vld [vmem:[%s0 + $0x360] sm:$0xff]
    %v180 = vld [vmem:[%s0 + $0x368] sm:$0xff]
    %v181 = vld [vmem:[%s0 + $0x370] sm:$0xff]
    %v182 = vld [vmem:[%s0 + $0x378] sm:$0xff]
    %v183 = vld [vmem:[#allocation2] sm:$0xff]
    %v184 = vld [vmem:[#allocation2 + $0x8] sm:$0xff]
    %v185 = vld [vmem:[#allocation2 + $0x10] sm:$0xff]
    %v186 = vld [vmem:[#allocation2 + $0x18] sm:$0xff]
    %v187 = vld [vmem:[#allocation2 + $0x20] sm:$0xff]
    %v188 = vld [vmem:[#allocation2 + $0x28] sm:$0xff]
    %v189 = vld [vmem:[#allocation2 + $0x30] sm:$0xff]
    %v190 = vld [vmem:[#allocation2 + $0x38] sm:$0xff]
    %v191 = vld [vmem:[#allocation2 + $0x40] sm:$0xff]
    %v192 = vld [vmem:[#allocation2 + $0x48] sm:$0xff]
    %v193 = vld [vmem:[#allocation2 + $0x50] sm:$0xff]
    %v194 = vld [vmem:[#allocation2 + $0x58] sm:$0xff]
    %v195 = vld [vmem:[#allocation2 + $0x60] sm:$0xff]
    %v196 = vld [vmem:[#allocation2 + $0x68] sm:$0xff]
    %v197 = vld [vmem:[#allocation2 + $0x70] sm:$0xff]
    %v198 = vld [vmem:[#allocation2 + $0x78] sm:$0xff]
    %v199 = vld [vmem:[#allocation2 + $0x80] sm:$0xff]
    %v200 = vld [vmem:[#allocation2 + $0x88] sm:$0xff]
    %v201 = vld [vmem:[#allocation2 + $0x90] sm:$0xff]
    %v202 = vld [vmem:[#allocation2 + $0x98] sm:$0xff]
    %v203 = vld [vmem:[#allocation2 + $0xa0] sm:$0xff]
    %v204 = vld [vmem:[#allocation2 + $0xa8] sm:$0xff]
    %v205 = vld [vmem:[#allocation2 + $0xb0] sm:$0xff]
    %v206 = vld [vmem:[#allocation2 + $0xb8] sm:$0xff]
    %v207 = vld [vmem:[#allocation2 + $0xc0] sm:$0xff]
    %v208 = vld [vmem:[#allocation2 + $0xc8] sm:$0xff]
    %v209 = vld [vmem:[#allocation2 + $0xd0] sm:$0xff]
    %v210 = vld [vmem:[#allocation2 + $0xd8] sm:$0xff]
    %v211 = vld [vmem:[#allocation2 + $0xe0] sm:$0xff]
    %v212 = vld [vmem:[#allocation2 + $0xe8] sm:$0xff]
    %v213 = vld [vmem:[#allocation2 + $0xf0] sm:$0xff]
    %v214 = vld [vmem:[#allocation2 + $0xf8] sm:$0xff]
    %v215 = vld [vmem:[#allocation2 + $0x100] sm:$0xff]
    %v216 = vld [vmem:[#allocation2 + $0x108] sm:$0xff]
    %v217 = vld [vmem:[#allocation2 + $0x110] sm:$0xff]
    %v218 = vld [vmem:[#allocation2 + $0x118] sm:$0xff]
    %v219 = vld [vmem:[#allocation2 + $0x120] sm:$0xff]
    %v220 = vld [vmem:[#allocation2 + $0x128] sm:$0xff]
    %v221 = vld [vmem:[#allocation2 + $0x130] sm:$0xff]
    %v222 = vld [vmem:[#allocation2 + $0x138] sm:$0xff]
    %v223 = vld [vmem:[#allocation2 + $0x140] sm:$0xff]
    %v224 = vld [vmem:[#allocation2 + $0x148] sm:$0xff]
    %v225 = vld [vmem:[#allocation2 + $0x150] sm:$0xff]
    %v226 = vld [vmem:[#allocation2 + $0x158] sm:$0xff]
    %v227 = vld [vmem:[#allocation2 + $0x160] sm:$0xff]
    %v228 = vld [vmem:[#allocation2 + $0x168] sm:$0xff]
    %v229 = vld [vmem:[#allocation2 + $0x170] sm:$0xff]
    %v230 = vld [vmem:[#allocation2 + $0x178] sm:$0xff]
    %v231 = vld [vmem:[#allocation2 + $0x180] sm:$0xff]
    %v232 = vld [vmem:[#allocation2 + $0x188] sm:$0xff]
    %v233 = vld [vmem:[#allocation2 + $0x190] sm:$0xff]
    %v234 = vld [vmem:[#allocation2 + $0x198] sm:$0xff]
    %v235 = vld [vmem:[#allocation2 + $0x1a0] sm:$0xff]
    %v236 = vld [vmem:[#allocation2 + $0x1a8] sm:$0xff]
    %v237 = vld [vmem:[#allocation2 + $0x1b0] sm:$0xff]
    %v238 = vld [vmem:[#allocation2 + $0x1b8] sm:$0xff]
    %v239 = vld [vmem:[#allocation2 + $0x1c0] sm:$0xff]
    %v240 = vld [vmem:[#allocation2 + $0x1c8] sm:$0xff]
    %v241 = vld [vmem:[#allocation2 + $0x1d0] sm:$0xff]
    %v242 = vld [vmem:[#allocation2 + $0x1d8] sm:$0xff]
    %v243 = vld [vmem:[#allocation2 + $0x1e0] sm:$0xff]
    %v244 = vld [vmem:[#allocation2 + $0x1e8] sm:$0xff]
    %v245 = vld [vmem:[#allocation2 + $0x1f0] sm:$0xff]
    %v246 = vld [vmem:[#allocation2 + $0x1f8] sm:$0xff]
    %v247 = vld [vmem:[#allocation2 + $0x200] sm:$0xff]
    %v248 = vld [vmem:[#allocation2 + $0x208] sm:$0xff]
    %v249 = vld [vmem:[#allocation2 + $0x210] sm:$0xff]
    %v250 = vld [vmem:[#allocation2 + $0x218] sm:$0xff]
    %v251 = vld [vmem:[#allocation2 + $0x220] sm:$0xff]
    %v252 = vld [vmem:[#allocation2 + $0x228] sm:$0xff]
    %v253 = vld [vmem:[#allocation2 + $0x230] sm:$0xff]
    %v254 = vld [vmem:[#allocation2 + $0x238] sm:$0xff]
    %v255 = vld [vmem:[#allocation2 + $0x240] sm:$0xff]
    %v256 = vld [vmem:[#allocation2 + $0x248] sm:$0xff]
    %v257 = vld [vmem:[#allocation2 + $0x250] sm:$0xff]
    %v258 = vld [vmem:[#allocation2 + $0x258] sm:$0xff]
    %v259 = vld [vmem:[#allocation2 + $0x260] sm:$0xff]
    %v260 = vld [vmem:[#allocation2 + $0x268] sm:$0xff]
    %v261 = vld [vmem:[#allocation2 + $0x270] sm:$0xff]
    %v262 = vld [vmem:[#allocation2 + $0x278] sm:$0xff]
    %v263 = vld [vmem:[#allocation2 + $0x280] sm:$0xff]
    %v264 = vld [vmem:[#allocation2 + $0x288] sm:$0xff]
    %v265 = vld [vmem:[#allocation2 + $0x290] sm:$0xff]
    %v266 = vld [vmem:[#allocation2 + $0x298] sm:$0xff]
    %v267 = vld [vmem:[#allocation2 + $0x2a0] sm:$0xff]
    %v268 = vld [vmem:[#allocation2 + $0x2a8] sm:$0xff]
    %v269 = vld [vmem:[#allocation2 + $0x2b0] sm:$0xff]
    %v270 = vld [vmem:[#allocation2 + $0x2b8] sm:$0xff]
    %v271 = vld [vmem:[#allocation2 + $0x2c0] sm:$0xff]
    %v272 = vld [vmem:[#allocation2 + $0x2c8] sm:$0xff]
    %v273 = vld [vmem:[#allocation2 + $0x2d0] sm:$0xff]
    %v274 = vld [vmem:[#allocation2 + $0x2d8] sm:$0xff]
    %v275 = vld [vmem:[#allocation2 + $0x2e0] sm:$0xff]
    %v276 = vld [vmem:[#allocation2 + $0x2e8] sm:$0xff]
    %v277 = vld [vmem:[#allocation2 + $0x2f0] sm:$0xff]
    %v278 = vld [vmem:[#allocation2 + $0x2f8] sm:$0xff]
    %v279 = vld [vmem:[#allocation2 + $0x300] sm:$0xff]
    %v280 = vld [vmem:[#allocation2 + $0x308] sm:$0xff]
    %v281 = vld [vmem:[#allocation2 + $0x310] sm:$0xff]
    %v282 = vld [vmem:[#allocation2 + $0x318] sm:$0xff]
    %v283 = vld [vmem:[#allocation2 + $0x320] sm:$0xff]
    %v284 = vld [vmem:[#allocation2 + $0x328] sm:$0xff]
    %v285 = vld [vmem:[#allocation2 + $0x330] sm:$0xff]
    %v286 = vld [vmem:[#allocation2 + $0x338] sm:$0xff]
    %v287 = vld [vmem:[#allocation2 + $0x340] sm:$0xff]
    %v288 = vld [vmem:[#allocation2 + $0x348] sm:$0xff]
    %v289 = vld [vmem:[#allocation2 + $0x350] sm:$0xff]
    %v290 = vld [vmem:[#allocation2 + $0x358] sm:$0xff]
    %v291 = vld [vmem:[#allocation2 + $0x360] sm:$0xff]
    %v292 = vld [vmem:[#allocation2 + $0x368] sm:$0xff]
    %v293 = vld [vmem:[#allocation2 + $0x370] sm:$0xff]
    %v294 = vld [vmem:[#allocation2 + $0x378] sm:$0xff]
    %v295 = vld [vmem:[#allocation2 + $0x380] sm:$0xff]
    %v296 = vld [vmem:[#allocation2 + $0x388] sm:$0xff]
    %v297 = vld [vmem:[#allocation2 + $0x390] sm:$0xff]
    %v298 = vld [vmem:[#allocation2 + $0x398] sm:$0xff]
    %v299 = vld [vmem:[#allocation2 + $0x3a0] sm:$0xff]
    %v300 = vld [vmem:[#allocation2 + $0x3a8] sm:$0xff]
    %v301 = vld [vmem:[#allocation2 + $0x3b0] sm:$0xff]
    %v302 = vld [vmem:[#allocation2 + $0x3b8] sm:$0xff]
    %v303 = vld [vmem:[#allocation2 + $0x3c0] sm:$0xff]
    %v304 = vld [vmem:[#allocation2 + $0x3c8] sm:$0xff]
    %v305 = vld [vmem:[#allocation2 + $0x3d0] sm:$0xff]
    %v306 = vld [vmem:[#allocation2 + $0x3d8] sm:$0xff]
    %v307 = vld [vmem:[#allocation2 + $0x3e0] sm:$0xff]
    %v308 = vld [vmem:[#allocation2 + $0x3e8] sm:$0xff]
    %v309 = vld [vmem:[#allocation2 + $0x3f0] sm:$0xff]
    %v310 = vld [vmem:[#allocation2 + $0x3f8] sm:$0xff]
    %v311 = vld [vmem:[#allocation2 + $0x400] sm:$0xff]
    %v312 = vld [vmem:[#allocation2 + $0x408] sm:$0xff]
    %v313 = vld [vmem:[#allocation2 + $0x410] sm:$0xff]
    %v314 = vld [vmem:[#allocation2 + $0x418] sm:$0xff]
    %v315 = vld [vmem:[#allocation2 + $0x420] sm:$0xff]
    %v316 = vld [vmem:[#allocation2 + $0x428] sm:$0xff]
    %v317 = vld [vmem:[#allocation2 + $0x430] sm:$0xff]
    %v318 = vld [vmem:[#allocation2 + $0x438] sm:$0xff]
    %v319 = vld [vmem:[#allocation2 + $0x440] sm:$0xff]
    %v320 = vld [vmem:[#allocation2 + $0x448] sm:$0xff]
    %v321 = vld [vmem:[#allocation2 + $0x450] sm:$0xff]
    %v322 = vld [vmem:[#allocation2 + $0x458] sm:$0xff]
    %v323 = vld [vmem:[#allocation2 + $0x460] sm:$0xff]
    %v324 = vld [vmem:[#allocation2 + $0x468] sm:$0xff]
    %v325 = vld [vmem:[#allocation2 + $0x470] sm:$0xff]
    %v326 = vld [vmem:[#allocation2 + $0x478] sm:$0xff]
    %v327 = vld [vmem:[#allocation2 + $0x480] sm:$0xff]
    %v328 = vld [vmem:[#allocation2 + $0x488] sm:$0xff]
    %v329 = vld [vmem:[#allocation2 + $0x490] sm:$0xff]
    %v330 = vld [vmem:[#allocation2 + $0x498] sm:$0xff]
    %v331 = vld [vmem:[#allocation2 + $0x4a0] sm:$0xff]
    %v332 = vld [vmem:[#allocation2 + $0x4a8] sm:$0xff]
    %v333 = vld [vmem:[#allocation2 + $0x4b0] sm:$0xff]
    %v334 = vld [vmem:[#allocation2 + $0x4b8] sm:$0xff]
    %v335 = vld [vmem:[#allocation2 + $0x4c0] sm:$0xff]
    %v336 = vld [vmem:[#allocation2 + $0x4c8] sm:$0xff]
    %v337 = vld [vmem:[#allocation2 + $0x4d0] sm:$0xff]
    %v338 = vld [vmem:[#allocation2 + $0x4d8] sm:$0xff]
    %v339 = vld [vmem:[#allocation2 + $0x4e0] sm:$0xff]
    %v340 = vld [vmem:[#allocation2 + $0x4e8] sm:$0xff]
    %v341 = vld [vmem:[#allocation2 + $0x4f0] sm:$0xff]
    %v342 = vld [vmem:[#allocation2 + $0x4f8] sm:$0xff]
    %v343 = vld [vmem:[#allocation2 + $0x500] sm:$0xff]
    %v344 = vld [vmem:[#allocation2 + $0x508] sm:$0xff]
    %v345 = vld [vmem:[#allocation2 + $0x510] sm:$0xff]
    %v346 = vld [vmem:[#allocation2 + $0x518] sm:$0xff]
    %v347 = vld [vmem:[#allocation2 + $0x520] sm:$0xff]
    %v348 = vld [vmem:[#allocation2 + $0x528] sm:$0xff]
    %v349 = vld [vmem:[#allocation2 + $0x530] sm:$0xff]
    %v350 = vld [vmem:[#allocation2 + $0x538] sm:$0xff]
    %v351 = vld [vmem:[#allocation2 + $0x540] sm:$0xff]
    %v352 = vld [vmem:[#allocation2 + $0x548] sm:$0xff]
    %v353 = vld [vmem:[#allocation2 + $0x550] sm:$0xff]
    %v354 = vld [vmem:[#allocation2 + $0x558] sm:$0xff]
    %v355 = vld [vmem:[#allocation2 + $0x560] sm:$0xff]
    %v356 = vld [vmem:[#allocation2 + $0x568] sm:$0xff]
    %v357 = vld [vmem:[#allocation2 + $0x570] sm:$0xff]
    %v358 = vld [vmem:[#allocation2 + $0x578] sm:$0xff]
    %v359 = vld [vmem:[#allocation2 + $0x580] sm:$0xff]
    %v360 = vld [vmem:[#allocation2 + $0x588] sm:$0xff]
    %v361 = vld [vmem:[#allocation2 + $0x590] sm:$0xff]
    %v362 = vld [vmem:[#allocation2 + $0x598] sm:$0xff]
    %v363 = vld [vmem:[#allocation2 + $0x5a0] sm:$0xff]
    %v364 = vld [vmem:[#allocation2 + $0x5a8] sm:$0xff]
    %v365 = vld [vmem:[#allocation2 + $0x5b0] sm:$0xff]
    %v366 = vld [vmem:[#allocation2 + $0x5b8] sm:$0xff]
    %v367 = vld [vmem:[#allocation2 + $0x5c0] sm:$0xff]
    %v368 = vld [vmem:[#allocation2 + $0x5c8] sm:$0xff]
    %v369 = vld [vmem:[#allocation2 + $0x5d0] sm:$0xff]
    %v370 = vld [vmem:[#allocation2 + $0x5d8] sm:$0xff]
    %v371 = vld [vmem:[#allocation2 + $0x5e0] sm:$0xff]
    %v372 = vld [vmem:[#allocation2 + $0x5e8] sm:$0xff]
    %v373 = vld [vmem:[#allocation2 + $0x5f0] sm:$0xff]
    %v374 = vld [vmem:[#allocation2 + $0x5f8] sm:$0xff]
    %v375 = vld [vmem:[#allocation2 + $0x600] sm:$0xff]
    %v376 = vld [vmem:[#allocation2 + $0x608] sm:$0xff]
    %v377 = vld [vmem:[#allocation2 + $0x610] sm:$0xff]
    %v378 = vld [vmem:[#allocation2 + $0x618] sm:$0xff]
    %v379 = vld [vmem:[#allocation2 + $0x620] sm:$0xff]
    %v380 = vld [vmem:[#allocation2 + $0x628] sm:$0xff]
    %v381 = vld [vmem:[#allocation2 + $0x630] sm:$0xff]
    %v382 = vld [vmem:[#allocation2 + $0x638] sm:$0xff]
    %v383 = vld [vmem:[#allocation2 + $0x640] sm:$0xff]
    %v384 = vld [vmem:[#allocation2 + $0x648] sm:$0xff]
    %v385 = vld [vmem:[#allocation2 + $0x650] sm:$0xff]
    %v386 = vld [vmem:[#allocation2 + $0x658] sm:$0xff]
    %v387 = vld [vmem:[#allocation2 + $0x660] sm:$0xff]
    %v388 = vld [vmem:[#allocation2 + $0x668] sm:$0xff]
    %v389 = vld [vmem:[#allocation2 + $0x670] sm:$0xff]
    %v390 = vld [vmem:[#allocation2 + $0x678] sm:$0xff]
    %v391 = vld [vmem:[#allocation2 + $0x680] sm:$0xff]
    %v392 = vld [vmem:[#allocation2 + $0x688] sm:$0xff]
    %v393 = vld [vmem:[#allocation2 + $0x690] sm:$0xff]
    %v394 = vld [vmem:[#allocation2 + $0x698] sm:$0xff]
    %v395 = vld [vmem:[#allocation2 + $0x6a0] sm:$0xff]
    %v396 = vld [vmem:[#allocation2 + $0x6a8] sm:$0xff]
    %v397 = vld [vmem:[#allocation2 + $0x6b0] sm:$0xff]
    %v398 = vld [vmem:[#allocation2 + $0x6b8] sm:$0xff]
    %v399 = vld [vmem:[#allocation2 + $0x6c0] sm:$0xff]
    %v400 = vld [vmem:[#allocation2 + $0x6c8] sm:$0xff]
    %v401 = vld [vmem:[#allocation2 + $0x6d0] sm:$0xff]
    %v402 = vld [vmem:[#allocation2 + $0x6d8] sm:$0xff]
    %v403 = vld [vmem:[#allocation2 + $0x6e0] sm:$0xff]
    %v404 = vld [vmem:[#allocation2 + $0x6e8] sm:$0xff]
    %v405 = vld [vmem:[#allocation2 + $0x6f0] sm:$0xff]
    %v406 = vld [vmem:[#allocation2 + $0x6f8] sm:$0xff]
    %v407 = vld [vmem:[#allocation2 + $0x700] sm:$0xff]
    %v408 = vld [vmem:[#allocation2 + $0x708] sm:$0xff]
    %v409 = vld [vmem:[#allocation2 + $0x710] sm:$0xff]
    %v410 = vld [vmem:[#allocation2 + $0x718] sm:$0xff]
    %v411 = vld [vmem:[#allocation2 + $0x720] sm:$0xff]
    %v412 = vld [vmem:[#allocation2 + $0x728] sm:$0xff]
    %v413 = vld [vmem:[#allocation2 + $0x730] sm:$0xff]
    %v414 = vld [vmem:[#allocation2 + $0x738] sm:$0xff]
    %v415 = vld [vmem:[#allocation2 + $0x740] sm:$0xff]
    %v416 = vld [vmem:[#allocation2 + $0x748] sm:$0xff]
    %v417 = vld [vmem:[#allocation2 + $0x750] sm:$0xff]
    %v418 = vld [vmem:[#allocation2 + $0x758] sm:$0xff]
    %v419 = vld [vmem:[#allocation2 + $0x760] sm:$0xff]
    %v420 = vld [vmem:[#allocation2 + $0x768] sm:$0xff]
    %v421 = vld [vmem:[#allocation2 + $0x770] sm:$0xff]
    %v422 = vld [vmem:[#allocation2 + $0x778] sm:$0xff]
    %v423 = vld [vmem:[#allocation2 + $0x780] sm:$0xff]
    %v424 = vld [vmem:[#allocation2 + $0x788] sm:$0xff]
    %v425 = vld [vmem:[#allocation2 + $0x790] sm:$0xff]
    %v426 = vld [vmem:[#allocation2 + $0x798] sm:$0xff]
    %v427 = vld [vmem:[#allocation2 + $0x7a0] sm:$0xff]
    %v428 = vld [vmem:[#allocation2 + $0x7a8] sm:$0xff]
    %v429 = vld [vmem:[#allocation2 + $0x7b0] sm:$0xff]
    %v430 = vld [vmem:[#allocation2 + $0x7b8] sm:$0xff]
    %v431 = vld [vmem:[#allocation2 + $0x7c0] sm:$0xff]
    %v432 = vld [vmem:[#allocation2 + $0x7c8] sm:$0xff]
    %v433 = vld [vmem:[#allocation2 + $0x7d0] sm:$0xff]
    %v434 = vld [vmem:[#allocation2 + $0x7d8] sm:$0xff]
    %v435 = vld [vmem:[#allocation2 + $0x7e0] sm:$0xff]
    %v436 = vld [vmem:[#allocation2 + $0x7e8] sm:$0xff]
    %v437 = vld [vmem:[#allocation2 + $0x7f0] sm:$0xff]
    %v438 = vld [vmem:[#allocation2 + $0x7f8] sm:$0xff]
    %v439 = vld [vmem:[#allocation2 + $0x800] sm:$0xff]
    %v440 = vld [vmem:[#allocation2 + $0x808] sm:$0xff]
    %v441 = vld [vmem:[#allocation2 + $0x810] sm:$0xff]
    %v442 = vld [vmem:[#allocation2 + $0x818] sm:$0xff]
    %v443 = vld [vmem:[#allocation2 + $0x820] sm:$0xff]
    %v444 = vld [vmem:[#allocation2 + $0x828] sm:$0xff]
    %v445 = vld [vmem:[#allocation2 + $0x830] sm:$0xff]
    %v446 = vld [vmem:[#allocation2 + $0x838] sm:$0xff]
    %v447 = vld [vmem:[#allocation2 + $0x840] sm:$0xff]
    %v448 = vld [vmem:[#allocation2 + $0x848] sm:$0xff]
    %v449 = vld [vmem:[#allocation2 + $0x850] sm:$0xff]
    %v450 = vld [vmem:[#allocation2 + $0x858] sm:$0xff]
    %v451 = vld [vmem:[#allocation2 + $0x860] sm:$0xff]
    %v452 = vld [vmem:[#allocation2 + $0x868] sm:$0xff]
    %v453 = vld [vmem:[#allocation2 + $0x870] sm:$0xff]
    %v454 = vld [vmem:[#allocation2 + $0x878] sm:$0xff]
    %v455 = vld [vmem:[#allocation2 + $0x880] sm:$0xff]
    %v456 = vld [vmem:[#allocation2 + $0x888] sm:$0xff]
    %v457 = vld [vmem:[#allocation2 + $0x890] sm:$0xff]
    %v458 = vld [vmem:[#allocation2 + $0x898] sm:$0xff]
    %v459 = vld [vmem:[#allocation2 + $0x8a0] sm:$0xff]
    %v460 = vld [vmem:[#allocation2 + $0x8a8] sm:$0xff]
    %v461 = vld [vmem:[#allocation2 + $0x8b0] sm:$0xff]
    %v462 = vld [vmem:[#allocation2 + $0x8b8] sm:$0xff]
    %v463 = vld [vmem:[#allocation2 + $0x8c0] sm:$0xff]
    %v464 = vld [vmem:[#allocation2 + $0x8c8] sm:$0xff]
    %v465 = vld [vmem:[#allocation2 + $0x8d0] sm:$0xff]
    %v466 = vld [vmem:[#allocation2 + $0x8d8] sm:$0xff]
    %v467 = vld [vmem:[#allocation2 + $0x8e0] sm:$0xff]
    %v468 = vld [vmem:[#allocation2 + $0x8e8] sm:$0xff]
    %v469 = vld [vmem:[#allocation2 + $0x8f0] sm:$0xff]
    %v470 = vld [vmem:[#allocation2 + $0x8f8] sm:$0xff]
    %v471 = vld [vmem:[#allocation2 + $0x900] sm:$0xff]
    %v472 = vld [vmem:[#allocation2 + $0x908] sm:$0xff]
    %v473 = vld [vmem:[#allocation2 + $0x910] sm:$0xff]
    %v474 = vld [vmem:[#allocation2 + $0x918] sm:$0xff]
    %v475 = vld [vmem:[#allocation2 + $0x920] sm:$0xff]
    %v476 = vld [vmem:[#allocation2 + $0x928] sm:$0xff]
    %v477 = vld [vmem:[#allocation2 + $0x930] sm:$0xff]
    %v478 = vld [vmem:[#allocation2 + $0x938] sm:$0xff]
    %v479 = vld [vmem:[#allocation2 + $0x940] sm:$0xff]
    %v480 = vld [vmem:[#allocation2 + $0x948] sm:$0xff]
    %v481 = vld [vmem:[#allocation2 + $0x950] sm:$0xff]
    %v482 = vld [vmem:[#allocation2 + $0x958] sm:$0xff]
    %v483 = vld [vmem:[#allocation2 + $0x960] sm:$0xff]
    %v484 = vld [vmem:[#allocation2 + $0x968] sm:$0xff]
    %v485 = vld [vmem:[#allocation2 + $0x970] sm:$0xff]
    %v486 = vld [vmem:[#allocation2 + $0x978] sm:$0xff]
    %v487 = vld [vmem:[#allocation2 + $0x980] sm:$0xff]
    %v488 = vld [vmem:[#allocation2 + $0x988] sm:$0xff]
    %v489 = vld [vmem:[#allocation2 + $0x990] sm:$0xff]
    %v490 = vld [vmem:[#allocation2 + $0x998] sm:$0xff]
    %v491 = vld [vmem:[#allocation2 + $0x9a0] sm:$0xff]
    %v492 = vld [vmem:[#allocation2 + $0x9a8] sm:$0xff]
    %v493 = vld [vmem:[#allocation2 + $0x9b0] sm:$0xff]
    %v494 = vld [vmem:[#allocation2 + $0x9b8] sm:$0xff]
    %v495 = vld [vmem:[#allocation2 + $0x9c0] sm:$0xff]
    %v496 = vld [vmem:[#allocation2 + $0x9c8] sm:$0xff]
    %v497 = vld [vmem:[#allocation2 + $0x9d0] sm:$0xff]
    %v498 = vld [vmem:[#allocation2 + $0x9d8] sm:$0xff]
    %v499 = vld [vmem:[#allocation2 + $0x9e0] sm:$0xff]
    %v500 = vld [vmem:[#allocation2 + $0x9e8] sm:$0xff]
    %v501 = vld [vmem:[#allocation2 + $0x9f0] sm:$0xff]
    %v502 = vld [vmem:[#allocation2 + $0x9f8] sm:$0xff]
    %v503 = vld [vmem:[#allocation2 + $0xa00] sm:$0xff]
    %v504 = vld [vmem:[#allocation2 + $0xa08] sm:$0xff]
    %v505 = vld [vmem:[#allocation2 + $0xa10] sm:$0xff]
    %v506 = vld [vmem:[#allocation2 + $0xa18] sm:$0xff]
    %v507 = vld [vmem:[#allocation2 + $0xa20] sm:$0xff]
    %v508 = vld [vmem:[#allocation2 + $0xa28] sm:$0xff]
    %v509 = vld [vmem:[#allocation2 + $0xa30] sm:$0xff]
    %v510 = vld [vmem:[#allocation2 + $0xa38] sm:$0xff]
    %v511 = vld [vmem:[#allocation2 + $0xa40] sm:$0xff]
    %v512 = vld [vmem:[#allocation2 + $0xa48] sm:$0xff]
    %v513 = vld [vmem:[#allocation2 + $0xa50] sm:$0xff]
    %v514 = vld [vmem:[#allocation2 + $0xa58] sm:$0xff]
    %v515 = vld [vmem:[#allocation2 + $0xa60] sm:$0xff]
    %v516 = vld [vmem:[#allocation2 + $0xa68] sm:$0xff]
    %v517 = vld [vmem:[#allocation2 + $0xa70] sm:$0xff]
    %v518 = vld [vmem:[#allocation2 + $0xa78] sm:$0xff]
    %v519 = vld [vmem:[#allocation2 + $0xa80] sm:$0xff]
    %v520 = vld [vmem:[#allocation2 + $0xa88] sm:$0xff]
    %v521 = vld [vmem:[#allocation2 + $0xa90] sm:$0xff]
    %v522 = vld [vmem:[#allocation2 + $0xa98] sm:$0xff]
    %v523 = vld [vmem:[#allocation2 + $0xaa0] sm:$0xff]
    %v524 = vld [vmem:[#allocation2 + $0xaa8] sm:$0xff]
    %v525 = vld [vmem:[#allocation2 + $0xab0] sm:$0xff]
    %v526 = vld [vmem:[#allocation2 + $0xab8] sm:$0xff]
    %v527 = vld [vmem:[#allocation2 + $0xac0] sm:$0xff]
    %v528 = vld [vmem:[#allocation2 + $0xac8] sm:$0xff]
    %v529 = vld [vmem:[#allocation2 + $0xad0] sm:$0xff]
    %v530 = vld [vmem:[#allocation2 + $0xad8] sm:$0xff]
    %v531 = vld [vmem:[#allocation2 + $0xae0] sm:$0xff]
    %v532 = vld [vmem:[#allocation2 + $0xae8] sm:$0xff]
    %v533 = vld [vmem:[#allocation2 + $0xaf0] sm:$0xff]
    %v534 = vld [vmem:[#allocation2 + $0xaf8] sm:$0xff]
    %v535 = vld [vmem:[#allocation2 + $0xb00] sm:$0xff]
    %v536 = vld [vmem:[#allocation2 + $0xb08] sm:$0xff]
    %v537 = vld [vmem:[#allocation2 + $0xb10] sm:$0xff]
    %v538 = vld [vmem:[#allocation2 + $0xb18] sm:$0xff]
    %v539 = vld [vmem:[#allocation2 + $0xb20] sm:$0xff]
    %v540 = vld [vmem:[#allocation2 + $0xb28] sm:$0xff]
    %v541 = vld [vmem:[#allocation2 + $0xb30] sm:$0xff]
    %v542 = vld [vmem:[#allocation2 + $0xb38] sm:$0xff]
    %v543 = vld [vmem:[#allocation2 + $0xb40] sm:$0xff]
    %v544 = vld [vmem:[#allocation2 + $0xb48] sm:$0xff]
    %v545 = vld [vmem:[#allocation2 + $0xb50] sm:$0xff]
    %v546 = vld [vmem:[#allocation2 + $0xb58] sm:$0xff]
    %v547 = vld [vmem:[#allocation2 + $0xb60] sm:$0xff]
    %v548 = vld [vmem:[#allocation2 + $0xb68] sm:$0xff]
    %v549 = vld [vmem:[#allocation2 + $0xb70] sm:$0xff]
    %v550 = vld [vmem:[#allocation2 + $0xb78] sm:$0xff]
    %v551 = vld [vmem:[#allocation2 + $0xb80] sm:$0xff]
    %v552 = vld [vmem:[#allocation2 + $0xb88] sm:$0xff]
    %v553 = vld [vmem:[#allocation2 + $0xb90] sm:$0xff]
    %v554 = vld [vmem:[#allocation2 + $0xb98] sm:$0xff]
    %v555 = vld [vmem:[#allocation2 + $0xba0] sm:$0xff]
    %v556 = vld [vmem:[#allocation2 + $0xba8] sm:$0xff]
    %v557 = vld [vmem:[#allocation2 + $0xbb0] sm:$0xff]
    %v558 = vld [vmem:[#allocation2 + $0xbb8] sm:$0xff]
    %v559 = vld [vmem:[#allocation2 + $0xbc0] sm:$0xff]
    %v560 = vld [vmem:[#allocation2 + $0xbc8] sm:$0xff]
    %v561 = vld [vmem:[#allocation2 + $0xbd0] sm:$0xff]
    %v562 = vld [vmem:[#allocation2 + $0xbd8] sm:$0xff]
    %v563 = vld [vmem:[#allocation2 + $0xbe0] sm:$0xff]
    %v564 = vld [vmem:[#allocation2 + $0xbe8] sm:$0xff]
    %v565 = vld [vmem:[#allocation2 + $0xbf0] sm:$0xff]
    %v566 = vld [vmem:[#allocation2 + $0xbf8] sm:$0xff]
    %v567 = vld [vmem:[#allocation2 + $0xc00] sm:$0xff]
    %v568 = vld [vmem:[#allocation2 + $0xc08] sm:$0xff]
    %v569 = vld [vmem:[#allocation2 + $0xc10] sm:$0xff]
    %v570 = vld [vmem:[#allocation2 + $0xc18] sm:$0xff]
    %v571 = vld [vmem:[#allocation2 + $0xc20] sm:$0xff]
    %v572 = vld [vmem:[#allocation2 + $0xc28] sm:$0xff]
    %v573 = vld [vmem:[#allocation2 + $0xc30] sm:$0xff]
    %v574 = vld [vmem:[#allocation2 + $0xc38] sm:$0xff]
    %v575 = vld [vmem:[#allocation4] sm:$0xf]
    %v577 = vlaneseq
    %v578 = vshrl.u32 %v577, 7
    %v579 = vsub.s32 0, %v578
    %v580 = vrot.slane %v575, %v579
    %v581 = vlaneseq
    %v582 = vshrl.u32 %v581, 7
    %v583 = vsub.s32 1, %v582
    %v584 = vrot.slane %v575, %v583
    %v585 = vlaneseq
    %v586 = vshrl.u32 %v585, 7
    %v587 = vsub.s32 2, %v586
    %v588 = vrot.slane %v575, %v587
    %v589 = vlaneseq
    %v590 = vshrl.u32 %v589, 7
    %v591 = vsub.s32 3, %v590
    %v592 = vrot.slane %v575, %v591
    %vm597 = vcmask 130048
    %v599 = vsel %vm597, %v77, 0
    %v602 = vsel %vm597, %v84, 0
    %v605 = vsel %vm597, %v91, 0
    %v608 = vsel %vm597, %v98, 0
    %v611 = vsel %vm597, %v105, 0
    %v614 = vsel %vm597, %v112, 0
    %v617 = vsel %vm597, %v119, 0
    %v620 = vsel %vm597, %v126, 0
    %v623 = vsel %vm597, %v133, 0
    %v626 = vsel %vm597, %v140, 0
    %v629 = vsel %vm597, %v147, 0
    %v632 = vsel %vm597, %v154, 0
    %v635 = vsel %vm597, %v161, 0
    %v638 = vsel %vm597, %v168, 0
    %v641 = vsel %vm597, %v175, 0
    %v644 = vsel %vm597, %v182, 0
    %646 = vmatprep.subr.mxu0 %v184
    %647 = vmatpush1.msra.mxu0 %v183
    %648 = vmatprep.subr.mxu0 %v188
    %649 = vmatpush1.msra.mxu0 %v187
    %650 = vmatprep.subr.mxu0 %v192
    %651 = vmatpush1.msra.mxu0 %v191
    %652 = vmatprep.subr.mxu0 %v196
    %653 = vmatpush1.msra.mxu0 %v195
    %654 = vmatprep.subr.mxu0 %v200
    %655 = vmatpush1.msra.mxu0 %v199
    %656 = vmatprep.subr.mxu0 %v204
    %657 = vmatpush1.msra.mxu0 %v203
    %658 = vmatprep.subr.mxu0 %v208
    %659 = vmatpush1.msra.mxu0 %v207
    %660 = vmatprep.subr.mxu0 %v212
    %661 = vmatpush1.msra.mxu0 %v211
    %662 = vmatprep.subr.mxu0 %v216
    %663 = vmatpush1.msra.mxu0 %v215
    %664 = vmatprep.subr.mxu0 %v220
    %665 = vmatpush1.msra.mxu0 %v219
    %666 = vmatprep.subr.mxu0 %v224
    %667 = vmatpush1.msra.mxu0 %v223
    %668 = vmatprep.subr.mxu0 %v228
    %669 = vmatpush1.msra.mxu0 %v227
    %670 = vmatprep.subr.mxu0 %v232
    %671 = vmatpush1.msra.mxu0 %v231
    %672 = vmatprep.subr.mxu0 %v236
    %673 = vmatpush1.msra.mxu0 %v235
    %674 = vmatprep.subr.mxu0 %v240
    %675 = vmatpush1.msra.mxu0 %v239
    %676 = vmatprep.subr.mxu0 %v244
    %677 = vmatpush1.msra.mxu0 %v243
    %678 = vmatprep.subr.mxu0 %v248
    %679 = vmatpush1.msra.mxu0 %v247
    %680 = vmatprep.subr.mxu0 %v252
    %681 = vmatpush1.msra.mxu0 %v251
    %682 = vmatprep.subr.mxu0 %v256
    %683 = vmatpush1.msra.mxu0 %v255
    %684 = vmatprep.subr.mxu0 %v260
    %685 = vmatpush1.msra.mxu0 %v259
    %686 = vmatprep.subr.mxu0 %v264
    %687 = vmatpush1.msra.mxu0 %v263
    %688 = vmatprep.subr.mxu0 %v268
    %689 = vmatpush1.msra.mxu0 %v267
    %690 = vmatprep.subr.mxu0 %v272
    %691 = vmatpush1.msra.mxu0 %v271
    %692 = vmatprep.subr.mxu0 %v276
    %693 = vmatpush1.msra.mxu0 %v275
    %694 = vmatprep.subr.mxu0 %v280
    %695 = vmatpush1.msra.mxu0 %v279
    %696 = vmatprep.subr.mxu0 %v284
    %697 = vmatpush1.msra.mxu0 %v283
    %698 = vmatprep.subr.mxu0 %v288
    %699 = vmatpush1.msra.mxu0 %v287
    %700 = vmatprep.subr.mxu0 %v292
    %701 = vmatpush1.msra.mxu0 %v291
    %702 = vmatprep.subr.mxu0 %v296
    %703 = vmatpush1.msra.mxu0 %v295
    %704 = vmatprep.subr.mxu0 %v300
    %705 = vmatpush1.msra.mxu0 %v299
    %706 = vmatprep.subr.mxu0 %v304
    %707 = vmatpush1.msra.mxu0 %v303
    %708 = vmatprep.subr.mxu0 %v308
    %709 = vmatpush1.msra.mxu0 %v307
    %710 = vmatprep.mubr.f32.mxu0 %v72
    %711 = vmatmul.mubr.f32.gmra.mrb[0].mxu0 %v71
    %v712 = vpop.f32.mrb[0].mxu0
    %v713 = vadd.f32 %v580, %v712
    %v714 = vpop.f32.mrb[0].mxu0
    %v715 = vadd.f32 %v584, %v714
    %716 = vmatprep.mubr.f32.mxu0 %v79
    %717 = vmatmul.mubr.f32.gmra.mrb[0].mxu0 %v78
    %v718 = vpop.f32.mrb[0].mxu0
    %v719 = vadd.f32 %v580, %v718
    %v720 = vpop.f32.mrb[0].mxu0
    %v721 = vadd.f32 %v584, %v720
    %722 = vmatprep.mubr.f32.mxu0 %v86
    %723 = vmatmul.mubr.f32.gmra.mrb[0].mxu0 %v85
    %v724 = vpop.f32.mrb[0].mxu0
    %v725 = vadd.f32 %v580, %v724
    %v726 = vpop.f32.mrb[0].mxu0
    %v727 = vadd.f32 %v584, %v726
    %728 = vmatprep.mubr.f32.mxu0 %v93
    %729 = vmatmul.mubr.f32.gmra.mrb[0].mxu0 %v92
    %v730 = vpop.f32.mrb[0].mxu0
    %v731 = vadd.f32 %v580, %v730
    %v732 = vpop.f32.mrb[0].mxu0
    %v733 = vadd.f32 %v584, %v732
    %734 = vmatprep.mubr.f32.mxu0 %v100
    %735 = vmatmul.mubr.f32.gmra.mrb[0].mxu0 %v99
    %v736 = vpop.f32.mrb[0].mxu0
    %v737 = vadd.f32 %v580, %v736
    %v738 = vpop.f32.mrb[0].mxu0
    %v739 = vadd.f32 %v584, %v738
    %740 = vmatprep.mubr.f32.mxu0 %v107
    %741 = vmatmul.mubr.f32.gmra.mrb[0].mxu0 %v106
    %v742 = vpop.f32.mrb[0].mxu0
    %v743 = vadd.f32 %v580, %v742
    %v744 = vpop.f32.mrb[0].mxu0
    %v745 = vadd.f32 %v584, %v744
    %746 = vmatprep.mubr.f32.mxu0 %v114
    %747 = vmatmul.mubr.f32.gmra.mrb[0].mxu0 %v113
    %v748 = vpop.f32.mrb[0].mxu0
    %v749 = vadd.f32 %v580, %v748
    %v750 = vpop.f32.mrb[0].mxu0
    %v751 = vadd.f32 %v584, %v750
    %752 = vmatprep.mubr.f32.mxu0 %v121
    %753 = vmatmul.mubr.f32.gmra.mrb[0].mxu0 %v120
    %v754 = vpop.f32.mrb[0].mxu0
    %v755 = vadd.f32 %v580, %v754
    %v756 = vpop.f32.mrb[0].mxu0
    %v757 = vadd.f32 %v584, %v756
    %758 = vmatprep.mubr.f32.mxu0 %v128
    %759 = vmatmul.mubr.f32.gmra.mrb[0].mxu0 %v127
    %v760 = vpop.f32.mrb[0].mxu0
    %v761 = vadd.f32 %v580, %v760
    %v762 = vpop.f32.mrb[0].mxu0
    %v763 = vadd.f32 %v584, %v762
    %764 = vmatprep.mubr.f32.mxu0 %v135
    %765 = vmatmul.mubr.f32.gmra.mrb[0].mxu0 %v134
    %v766 = vpop.f32.mrb[0].mxu0
    %v767 = vadd.f32 %v580, %v766
    %v768 = vpop.f32.mrb[0].mxu0
    %v769 = vadd.f32 %v584, %v768
    %770 = vmatprep.mubr.f32.mxu0 %v142
    %771 = vmatmul.mubr.f32.gmra.mrb[0].mxu0 %v141
    %v772 = vpop.f32.mrb[0].mxu0
    %v773 = vadd.f32 %v580, %v772
    %v774 = vpop.f32.mrb[0].mxu0
    %v775 = vadd.f32 %v584, %v774
    %776 = vmatprep.mubr.f32.mxu0 %v149
    %777 = vmatmul.mubr.f32.gmra.mrb[0].mxu0 %v148
    %v778 = vpop.f32.mrb[0].mxu0
    %v779 = vadd.f32 %v580, %v778
    %v780 = vpop.f32.mrb[0].mxu0
    %v781 = vadd.f32 %v584, %v780
    %782 = vmatprep.mubr.f32.mxu0 %v156
    %783 = vmatmul.mubr.f32.gmra.mrb[0].mxu0 %v155
    %v784 = vpop.f32.mrb[0].mxu0
    %v785 = vadd.f32 %v580, %v784
    %v786 = vpop.f32.mrb[0].mxu0
    %v787 = vadd.f32 %v584, %v786
    %788 = vmatprep.mubr.f32.mxu0 %v163
    %789 = vmatmul.mubr.f32.gmra.mrb[0].mxu0 %v162
    %v790 = vpop.f32.mrb[0].mxu0
    %v791 = vadd.f32 %v580, %v790
    %v792 = vpop.f32.mrb[0].mxu0
    %v793 = vadd.f32 %v584, %v792
    %794 = vmatprep.mubr.f32.mxu0 %v170
    %795 = vmatmul.mubr.f32.gmra.mrb[0].mxu0 %v169
    %v796 = vpop.f32.mrb[0].mxu0
    %v797 = vadd.f32 %v580, %v796
    %v798 = vpop.f32.mrb[0].mxu0
    %v799 = vadd.f32 %v584, %v798
    %800 = vmatprep.mubr.f32.mxu0 %v177
    %801 = vmatmul.mubr.f32.gmra.mrb[0].mxu0 %v176
    %v802 = vpop.f32.mrb[0].mxu0
    %v803 = vadd.f32 %v580, %v802
    %v804 = vpop.f32.mrb[0].mxu0
    %v805 = vadd.f32 %v584, %v804
    %806 = vdwg.mxu0
    %807 = vmatprep.subr.mxu0 %v312
    %808 = vmatpush1.msra.mxu0 %v311
    %809 = vmatprep.subr.mxu0 %v316
    %810 = vmatpush1.msra.mxu0 %v315
    %811 = vmatprep.subr.mxu0 %v320
    %812 = vmatpush1.msra.mxu0 %v319
    %813 = vmatprep.subr.mxu0 %v324
    %814 = vmatpush1.msra.mxu0 %v323
    %815 = vmatprep.subr.mxu0 %v328
    %816 = vmatpush1.msra.mxu0 %v327
    %817 = vmatprep.subr.mxu0 %v332
    %818 = vmatpush1.msra.mxu0 %v331
    %819 = vmatprep.subr.mxu0 %v336
    %820 = vmatpush1.msra.mxu0 %v335
    %821 = vmatprep.subr.mxu0 %v340
    %822 = vmatpush1.msra.mxu0 %v339
    %823 = vmatprep.subr.mxu0 %v344
    %824 = vmatpush1.msra.mxu0 %v343
    %825 = vmatprep.subr.mxu0 %v348
    %826 = vmatpush1.msra.mxu0 %v347
    %827 = vmatprep.subr.mxu0 %v352
    %828 = vmatpush1.msra.mxu0 %v351
    %829 = vmatprep.subr.mxu0 %v356
    %830 = vmatpush1.msra.mxu0 %v355
    %831 = vmatprep.subr.mxu0 %v360
    %832 = vmatpush1.msra.mxu0 %v359
    %833 = vmatprep.subr.mxu0 %v364
    %834 = vmatpush1.msra.mxu0 %v363
    %835 = vmatprep.subr.mxu0 %v368
    %836 = vmatpush1.msra.mxu0 %v367
    %837 = vmatprep.subr.mxu0 %v372
    %838 = vmatpush1.msra.mxu0 %v371
    %839 = vmatprep.subr.mxu0 %v376
    %840 = vmatpush1.msra.mxu0 %v375
    %841 = vmatprep.subr.mxu0 %v380
    %842 = vmatpush1.msra.mxu0 %v379
    %843 = vmatprep.subr.mxu0 %v384
    %844 = vmatpush1.msra.mxu0 %v383
    %845 = vmatprep.subr.mxu0 %v388
    %846 = vmatpush1.msra.mxu0 %v387
    %847 = vmatprep.subr.mxu0 %v392
    %848 = vmatpush1.msra.mxu0 %v391
    %849 = vmatprep.subr.mxu0 %v396
    %850 = vmatpush1.msra.mxu0 %v395
    %851 = vmatprep.subr.mxu0 %v400
    %852 = vmatpush1.msra.mxu0 %v399
    %853 = vmatprep.subr.mxu0 %v404
    %854 = vmatpush1.msra.mxu0 %v403
    %855 = vmatprep.subr.mxu0 %v408
    %856 = vmatpush1.msra.mxu0 %v407
    %857 = vmatprep.subr.mxu0 %v412
    %858 = vmatpush1.msra.mxu0 %v411
    %859 = vmatprep.subr.mxu0 %v416
    %860 = vmatpush1.msra.mxu0 %v415
    %861 = vmatprep.subr.mxu0 %v420
    %862 = vmatpush1.msra.mxu0 %v419
    %863 = vmatprep.subr.mxu0 %v424
    %864 = vmatpush1.msra.mxu0 %v423
    %865 = vmatprep.subr.mxu0 %v428
    %866 = vmatpush1.msra.mxu0 %v427
    %867 = vmatprep.subr.mxu0 %v432
    %868 = vmatpush1.msra.mxu0 %v431
    %869 = vmatprep.subr.mxu0 %v436
    %870 = vmatpush1.msra.mxu0 %v435
    %871 = vmatprep.mubr.f32.mxu0 %v74
    %872 = vmatmul.mubr.f32.gmra.mrb[0].mxu0 %v73
    %v873 = vpop.f32.mrb[0].mxu0
    %v874 = vadd.f32 %v713, %v873
    %v875 = vpop.f32.mrb[0].mxu0
    %v876 = vadd.f32 %v715, %v875
    %877 = vmatprep.mubr.f32.mxu0 %v81
    %878 = vmatmul.mubr.f32.gmra.mrb[0].mxu0 %v80
    %v879 = vpop.f32.mrb[0].mxu0
    %v880 = vadd.f32 %v719, %v879
    %v881 = vpop.f32.mrb[0].mxu0
    %v882 = vadd.f32 %v721, %v881
    %883 = vmatprep.mubr.f32.mxu0 %v88
    %884 = vmatmul.mubr.f32.gmra.mrb[0].mxu0 %v87
    %v885 = vpop.f32.mrb[0].mxu0
    %v886 = vadd.f32 %v725, %v885
    %v887 = vpop.f32.mrb[0].mxu0
    %v888 = vadd.f32 %v727, %v887
    %889 = vmatprep.mubr.f32.mxu0 %v95
    %890 = vmatmul.mubr.f32.gmra.mrb[0].mxu0 %v94
    %v891 = vpop.f32.mrb[0].mxu0
    %v892 = vadd.f32 %v731, %v891
    %v893 = vpop.f32.mrb[0].mxu0
    %v894 = vadd.f32 %v733, %v893
    %895 = vmatprep.mubr.f32.mxu0 %v102
    %896 = vmatmul.mubr.f32.gmra.mrb[0].mxu0 %v101
    %v897 = vpop.f32.mrb[0].mxu0
    %v898 = vadd.f32 %v737, %v897
    %v899 = vpop.f32.mrb[0].mxu0
    %v900 = vadd.f32 %v739, %v899
    %901 = vmatprep.mubr.f32.mxu0 %v109
    %902 = vmatmul.mubr.f32.gmra.mrb[0].mxu0 %v108
    %v903 = vpop.f32.mrb[0].mxu0
    %v904 = vadd.f32 %v743, %v903
    %v905 = vpop.f32.mrb[0].mxu0
    %v906 = vadd.f32 %v745, %v905
    %907 = vmatprep.mubr.f32.mxu0 %v116
    %908 = vmatmul.mubr.f32.gmra.mrb[0].mxu0 %v115
    %v909 = vpop.f32.mrb[0].mxu0
    %v910 = vadd.f32 %v749, %v909
    %v911 = vpop.f32.mrb[0].mxu0
    %v912 = vadd.f32 %v751, %v911
    %913 = vmatprep.mubr.f32.mxu0 %v123
    %914 = vmatmul.mubr.f32.gmra.mrb[0].mxu0 %v122
    %v915 = vpop.f32.mrb[0].mxu0
    %v916 = vadd.f32 %v755, %v915
    %v917 = vpop.f32.mrb[0].mxu0
    %v918 = vadd.f32 %v757, %v917
    %919 = vmatprep.mubr.f32.mxu0 %v130
    %920 = vmatmul.mubr.f32.gmra.mrb[0].mxu0 %v129
    %v921 = vpop.f32.mrb[0].mxu0
    %v922 = vadd.f32 %v761, %v921
    %v923 = vpop.f32.mrb[0].mxu0
    %v924 = vadd.f32 %v763, %v923
    %925 = vmatprep.mubr.f32.mxu0 %v137
    %926 = vmatmul.mubr.f32.gmra.mrb[0].mxu0 %v136
    %v927 = vpop.f32.mrb[0].mxu0
    %v928 = vadd.f32 %v767, %v927
    %v929 = vpop.f32.mrb[0].mxu0
    %v930 = vadd.f32 %v769, %v929
    %931 = vmatprep.mubr.f32.mxu0 %v144
    %932 = vmatmul.mubr.f32.gmra.mrb[0].mxu0 %v143
    %v933 = vpop.f32.mrb[0].mxu0
    %v934 = vadd.f32 %v773, %v933
    %v935 = vpop.f32.mrb[0].mxu0
    %v936 = vadd.f32 %v775, %v935
    %937 = vmatprep.mubr.f32.mxu0 %v151
    %938 = vmatmul.mubr.f32.gmra.mrb[0].mxu0 %v150
    %v939 = vpop.f32.mrb[0].mxu0
    %v940 = vadd.f32 %v779, %v939
    %v941 = vpop.f32.mrb[0].mxu0
    %v942 = vadd.f32 %v781, %v941
    %943 = vmatprep.mubr.f32.mxu0 %v158
    %944 = vmatmul.mubr.f32.gmra.mrb[0].mxu0 %v157
    %v945 = vpop.f32.mrb[0].mxu0
    %v946 = vadd.f32 %v785, %v945
    %v947 = vpop.f32.mrb[0].mxu0
    %v948 = vadd.f32 %v787, %v947
    %949 = vmatprep.mubr.f32.mxu0 %v165
    %950 = vmatmul.mubr.f32.gmra.mrb[0].mxu0 %v164
    %v951 = vpop.f32.mrb[0].mxu0
    %v952 = vadd.f32 %v791, %v951
    %v953 = vpop.f32.mrb[0].mxu0
    %v954 = vadd.f32 %v793, %v953
    %955 = vmatprep.mubr.f32.mxu0 %v172
    %956 = vmatmul.mubr.f32.gmra.mrb[0].mxu0 %v171
    %v957 = vpop.f32.mrb[0].mxu0
    %v958 = vadd.f32 %v797, %v957
    %v959 = vpop.f32.mrb[0].mxu0
    %v960 = vadd.f32 %v799, %v959
    %961 = vmatprep.mubr.f32.mxu0 %v179
    %962 = vmatmul.mubr.f32.gmra.mrb[0].mxu0 %v178
    %v963 = vpop.f32.mrb[0].mxu0
    %v964 = vadd.f32 %v803, %v963
    %v965 = vpop.f32.mrb[0].mxu0
    %v966 = vadd.f32 %v805, %v965
    %967 = vdwg.mxu0
    %968 = vmatprep.subr.mxu0 %v440
    %969 = vmatpush1.msra.mxu0 %v439
    %970 = vmatprep.subr.mxu0 %v444
    %971 = vmatpush1.msra.mxu0 %v443
    %972 = vmatprep.subr.mxu0 %v448
    %973 = vmatpush1.msra.mxu0 %v447
    %974 = vmatprep.subr.mxu0 %v452
    %975 = vmatpush1.msra.mxu0 %v451
    %976 = vmatprep.subr.mxu0 %v456
    %977 = vmatpush1.msra.mxu0 %v455
    %978 = vmatprep.subr.mxu0 %v460
    %979 = vmatpush1.msra.mxu0 %v459
    %980 = vmatprep.subr.mxu0 %v464
    %981 = vmatpush1.msra.mxu0 %v463
    %982 = vmatprep.subr.mxu0 %v468
    %983 = vmatpush1.msra.mxu0 %v467
    %984 = vmatprep.subr.mxu0 %v472
    %985 = vmatpush1.msra.mxu0 %v471
    %986 = vmatprep.subr.mxu0 %v476
    %987 = vmatpush1.msra.mxu0 %v475
    %988 = vmatprep.subr.mxu0 %v480
    %989 = vmatpush1.msra.mxu0 %v479
    %990 = vmatprep.subr.mxu0 %v484
    %991 = vmatpush1.msra.mxu0 %v483
    %992 = vmatprep.subr.mxu0 %v488
    %993 = vmatpush1.msra.mxu0 %v487
    %994 = vmatprep.subr.mxu0 %v492
    %995 = vmatpush1.msra.mxu0 %v491
    %996 = vmatprep.subr.mxu0 %v496
    %997 = vmatpush1.msra.mxu0 %v495
    %998 = vmatprep.subr.mxu0 %v500
    %999 = vmatpush1.msra.mxu0 %v499
    %1000 = vmatprep.subr.mxu0 %v504
    %1001 = vmatpush1.msra.mxu0 %v503
    %1002 = vmatprep.subr.mxu0 %v508
    %1003 = vmatpush1.msra.mxu0 %v507
    %1004 = vmatprep.subr.mxu0 %v512
    %1005 = vmatpush1.msra.mxu0 %v511
    %1006 = vmatprep.subr.mxu0 %v516
    %1007 = vmatpush1.msra.mxu0 %v515
    %1008 = vmatprep.subr.mxu0 %v520
    %1009 = vmatpush1.msra.mxu0 %v519
    %1010 = vmatprep.subr.mxu0 %v524
    %1011 = vmatpush1.msra.mxu0 %v523
    %1012 = vmatprep.subr.mxu0 %v528
    %1013 = vmatpush1.msra.mxu0 %v527
    %1014 = vmatprep.subr.mxu0 %v532
    %1015 = vmatpush1.msra.mxu0 %v531
    %1016 = vmatprep.subr.mxu0 %v536
    %1017 = vmatpush1.msra.mxu0 %v535
    %1018 = vmatprep.subr.mxu0 %v540
    %1019 = vmatpush1.msra.mxu0 %v539
    %1020 = vmatprep.subr.mxu0 %v544
    %1021 = vmatpush1.msra.mxu0 %v543
    %1022 = vmatprep.subr.mxu0 %v548
    %1023 = vmatpush1.msra.mxu0 %v547
    %1024 = vmatprep.subr.mxu0 %v552
    %1025 = vmatpush1.msra.mxu0 %v551
    %1026 = vmatprep.subr.mxu0 %v556
    %1027 = vmatpush1.msra.mxu0 %v555
    %1028 = vmatprep.subr.mxu0 %v560
    %1029 = vmatpush1.msra.mxu0 %v559
    %1030 = vmatprep.subr.mxu0 %v564
    %1031 = vmatpush1.msra.mxu0 %v563
    %1032 = vmatprep.mubr.f32.mxu0 %v76
    %1033 = vmatmul.mubr.f32.gmra.mrb[0].mxu0 %v75
    %v1034 = vpop.f32.mrb[0].mxu0
    %v1035 = vadd.f32 %v874, %v1034
    %v1036 = vpop.f32.mrb[0].mxu0
    %v1037 = vadd.f32 %v876, %v1036
    %1038 = vmatprep.mubr.f32.mxu0 %v83
    %1039 = vmatmul.mubr.f32.gmra.mrb[0].mxu0 %v82
    %v1040 = vpop.f32.mrb[0].mxu0
    %v1041 = vadd.f32 %v880, %v1040
    %v1042 = vpop.f32.mrb[0].mxu0
    %v1043 = vadd.f32 %v882, %v1042
    %1044 = vmatprep.mubr.f32.mxu0 %v90
    %1045 = vmatmul.mubr.f32.gmra.mrb[0].mxu0 %v89
    %v1046 = vpop.f32.mrb[0].mxu0
    %v1047 = vadd.f32 %v886, %v1046
    %v1048 = vpop.f32.mrb[0].mxu0
    %v1049 = vadd.f32 %v888, %v1048
    %1050 = vmatprep.mubr.f32.mxu0 %v97
    %1051 = vmatmul.mubr.f32.gmra.mrb[0].mxu0 %v96
    %v1052 = vpop.f32.mrb[0].mxu0
    %v1053 = vadd.f32 %v892, %v1052
    %v1054 = vpop.f32.mrb[0].mxu0
    %v1055 = vadd.f32 %v894, %v1054
    %1056 = vmatprep.mubr.f32.mxu0 %v104
    %1057 = vmatmul.mubr.f32.gmra.mrb[0].mxu0 %v103
    %v1058 = vpop.f32.mrb[0].mxu0
    %v1059 = vadd.f32 %v898, %v1058
    %v1060 = vpop.f32.mrb[0].mxu0
    %v1061 = vadd.f32 %v900, %v1060
    %1062 = vmatprep.mubr.f32.mxu0 %v111
    %1063 = vmatmul.mubr.f32.gmra.mrb[0].mxu0 %v110
    %v1064 = vpop.f32.mrb[0].mxu0
    %v1065 = vadd.f32 %v904, %v1064
    %v1066 = vpop.f32.mrb[0].mxu0
    %v1067 = vadd.f32 %v906, %v1066
    %1068 = vmatprep.mubr.f32.mxu0 %v118
    %1069 = vmatmul.mubr.f32.gmra.mrb[0].mxu0 %v117
    %v1070 = vpop.f32.mrb[0].mxu0
    %v1071 = vadd.f32 %v910, %v1070
    %v1072 = vpop.f32.mrb[0].mxu0
    %v1073 = vadd.f32 %v912, %v1072
    %1074 = vmatprep.mubr.f32.mxu0 %v125
    %1075 = vmatmul.mubr.f32.gmra.mrb[0].mxu0 %v124
    %v1076 = vpop.f32.mrb[0].mxu0
    %v1077 = vadd.f32 %v916, %v1076
    %v1078 = vpop.f32.mrb[0].mxu0
    %v1079 = vadd.f32 %v918, %v1078
    %1080 = vmatprep.mubr.f32.mxu0 %v132
    %1081 = vmatmul.mubr.f32.gmra.mrb[0].mxu0 %v131
    %v1082 = vpop.f32.mrb[0].mxu0
    %v1083 = vadd.f32 %v922, %v1082
    %v1084 = vpop.f32.mrb[0].mxu0
    %v1085 = vadd.f32 %v924, %v1084
    %1086 = vmatprep.mubr.f32.mxu0 %v139
    %1087 = vmatmul.mubr.f32.gmra.mrb[0].mxu0 %v138
    %v1088 = vpop.f32.mrb[0].mxu0
    %v1089 = vadd.f32 %v928, %v1088
    %v1090 = vpop.f32.mrb[0].mxu0
    %v1091 = vadd.f32 %v930, %v1090
    %1092 = vmatprep.mubr.f32.mxu0 %v146
    %1093 = vmatmul.mubr.f32.gmra.mrb[0].mxu0 %v145
    %v1094 = vpop.f32.mrb[0].mxu0
    %v1095 = vadd.f32 %v934, %v1094
    %v1096 = vpop.f32.mrb[0].mxu0
    %v1097 = vadd.f32 %v936, %v1096
    %1098 = vmatprep.mubr.f32.mxu0 %v153
    %1099 = vmatmul.mubr.f32.gmra.mrb[0].mxu0 %v152
    %v1100 = vpop.f32.mrb[0].mxu0
    %v1101 = vadd.f32 %v940, %v1100
    %v1102 = vpop.f32.mrb[0].mxu0
    %v1103 = vadd.f32 %v942, %v1102
    %1104 = vmatprep.mubr.f32.mxu0 %v160
    %1105 = vmatmul.mubr.f32.gmra.mrb[0].mxu0 %v159
    %v1106 = vpop.f32.mrb[0].mxu0
    %v1107 = vadd.f32 %v946, %v1106
    %v1108 = vpop.f32.mrb[0].mxu0
    %v1109 = vadd.f32 %v948, %v1108
    %1110 = vmatprep.mubr.f32.mxu0 %v167
    %1111 = vmatmul.mubr.f32.gmra.mrb[0].mxu0 %v166
    %v1112 = vpop.f32.mrb[0].mxu0
    %v1113 = vadd.f32 %v952, %v1112
    %v1114 = vpop.f32.mrb[0].mxu0
    %v1115 = vadd.f32 %v954, %v1114
    %1116 = vmatprep.mubr.f32.mxu0 %v174
    %1117 = vmatmul.mubr.f32.gmra.mrb[0].mxu0 %v173
    %v1118 = vpop.f32.mrb[0].mxu0
    %v1119 = vadd.f32 %v958, %v1118
    %v1120 = vpop.f32.mrb[0].mxu0
    %v1121 = vadd.f32 %v960, %v1120
    %1122 = vmatprep.mubr.f32.mxu0 %v181
    %1123 = vmatmul.mubr.f32.gmra.mrb[0].mxu0 %v180
    %v1124 = vpop.f32.mrb[0].mxu0
    %v1125 = vadd.f32 %v964, %v1124
    %v1126 = vpop.f32.mrb[0].mxu0
    %v1127 = vadd.f32 %v966, %v1126
    %1128 = vdwg.mxu0
    %1129 = vmatprep.subr.mxu0 %v568
    %1130 = vmatpush1.msra.mxu0 %v567
    %1131 = vmatprep.subr.mxu0 %v572
    %1132 = vmatpush1.msra.mxu0 %v571
    %1133 = vmatprep.subr.mxu0 0.0
    %1134 = vmatpush1.msra.mxu0 0.0
    %1135 = vmatprep.subr.mxu0 0.0
    %1136 = vmatpush1.msra.mxu0 0.0
    %1137 = vmatprep.subr.mxu0 0.0
    %1138 = vmatpush1.msra.mxu0 0.0
    %1139 = vmatprep.subr.mxu0 0.0
    %1140 = vmatpush1.msra.mxu0 0.0
    %1141 = vmatprep.subr.mxu0 0.0
    %1142 = vmatpush1.msra.mxu0 0.0
    %1143 = vmatprep.subr.mxu0 0.0
    %1144 = vmatpush1.msra.mxu0 0.0
    %1145 = vmatprep.subr.mxu0 0.0
    %1146 = vmatpush1.msra.mxu0 0.0
    %1147 = vmatprep.subr.mxu0 0.0
    %1148 = vmatpush1.msra.mxu0 0.0
    %1149 = vmatprep.subr.mxu0 0.0
    %1150 = vmatpush1.msra.mxu0 0.0
    %1151 = vmatprep.subr.mxu0 0.0
    %1152 = vmatpush1.msra.mxu0 0.0
    %1153 = vmatprep.subr.mxu0 0.0
    %1154 = vmatpush1.msra.mxu0 0.0
    %1155 = vmatprep.subr.mxu0 0.0
    %1156 = vmatpush1.msra.mxu0 0.0
    %1157 = vmatprep.subr.mxu0 0.0
    %1158 = vmatpush1.msra.mxu0 0.0
    %1159 = vmatprep.subr.mxu0 0.0
    %1160 = vmatpush1.msra.mxu0 0.0
    %1161 = vmatprep.subr.mxu0 0.0
    %1162 = vmatpush1.msra.mxu0 0.0
    %1163 = vmatprep.subr.mxu0 0.0
    %1164 = vmatpush1.msra.mxu0 0.0
    %1165 = vmatprep.subr.mxu0 0.0
    %1166 = vmatpush1.msra.mxu0 0.0
    %1167 = vmatprep.subr.mxu0 0.0
    %1168 = vmatpush1.msra.mxu0 0.0
    %1169 = vmatprep.subr.mxu0 0.0
    %1170 = vmatpush1.msra.mxu0 0.0
    %1171 = vmatprep.subr.mxu0 0.0
    %1172 = vmatpush1.msra.mxu0 0.0
    %1173 = vmatprep.subr.mxu0 0.0
    %1174 = vmatpush1.msra.mxu0 0.0
    %1175 = vmatprep.subr.mxu0 0.0
    %1176 = vmatpush1.msra.mxu0 0.0
    %1177 = vmatprep.subr.mxu0 0.0
    %1178 = vmatpush1.msra.mxu0 0.0
    %1179 = vmatprep.subr.mxu0 0.0
    %1180 = vmatpush1.msra.mxu0 0.0
    %1181 = vmatprep.subr.mxu0 0.0
    %1182 = vmatpush1.msra.mxu0 0.0
    %1183 = vmatprep.subr.mxu0 0.0
    %1184 = vmatpush1.msra.mxu0 0.0
    %1185 = vmatprep.subr.mxu0 0.0
    %1186 = vmatpush1.msra.mxu0 0.0
    %1187 = vmatprep.subr.mxu0 0.0
    %1188 = vmatpush1.msra.mxu0 0.0
    %1189 = vmatprep.subr.mxu0 0.0
    %1190 = vmatpush1.msra.mxu0 0.0
    %1191 = vmatprep.subr.mxu0 0.0
    %1192 = vmatpush1.msra.mxu0 0.0
    %1193 = vmatprep.mubr.f32.mxu0 0.0
    %1194 = vmatmul.mubr.f32.gmra.mrb[0].mxu0 %v599
    %v1195 = vpop.f32.mrb[0].mxu0
    %v1196 = vadd.f32 %v1035, %v1195
    %v1197 = vpop.f32.mrb[0].mxu0
    %v1198 = vadd.f32 %v1037, %v1197
    %1199 = vmatprep.mubr.f32.mxu0 0.0
    %1200 = vmatmul.mubr.f32.gmra.mrb[0].mxu0 %v602
    %v1201 = vpop.f32.mrb[0].mxu0
    %v1202 = vadd.f32 %v1041, %v1201
    %v1203 = vpop.f32.mrb[0].mxu0
    %v1204 = vadd.f32 %v1043, %v1203
    %1205 = vmatprep.mubr.f32.mxu0 0.0
    %1206 = vmatmul.mubr.f32.gmra.mrb[0].mxu0 %v605
    %v1207 = vpop.f32.mrb[0].mxu0
    %v1208 = vadd.f32 %v1047, %v1207
    %v1209 = vpop.f32.mrb[0].mxu0
    %v1210 = vadd.f32 %v1049, %v1209
    %1211 = vmatprep.mubr.f32.mxu0 0.0
    %1212 = vmatmul.mubr.f32.gmra.mrb[0].mxu0 %v608
    %v1213 = vpop.f32.mrb[0].mxu0
    %v1214 = vadd.f32 %v1053, %v1213
    %v1215 = vpop.f32.mrb[0].mxu0
    %v1216 = vadd.f32 %v1055, %v1215
    %1217 = vmatprep.mubr.f32.mxu0 0.0
    %1218 = vmatmul.mubr.f32.gmra.mrb[0].mxu0 %v611
    %v1219 = vpop.f32.mrb[0].mxu0
    %v1220 = vadd.f32 %v1059, %v1219
    %v1221 = vpop.f32.mrb[0].mxu0
    %v1222 = vadd.f32 %v1061, %v1221
    %1223 = vmatprep.mubr.f32.mxu0 0.0
    %1224 = vmatmul.mubr.f32.gmra.mrb[0].mxu0 %v614
    %v1225 = vpop.f32.mrb[0].mxu0
    %v1226 = vadd.f32 %v1065, %v1225
    %v1227 = vpop.f32.mrb[0].mxu0
    %v1228 = vadd.f32 %v1067, %v1227
    %1229 = vmatprep.mubr.f32.mxu0 0.0
    %1230 = vmatmul.mubr.f32.gmra.mrb[0].mxu0 %v617
    %v1231 = vpop.f32.mrb[0].mxu0
    %v1232 = vadd.f32 %v1071, %v1231
    %v1233 = vpop.f32.mrb[0].mxu0
    %v1234 = vadd.f32 %v1073, %v1233
    %1235 = vmatprep.mubr.f32.mxu0 0.0
    %1236 = vmatmul.mubr.f32.gmra.mrb[0].mxu0 %v620
    %v1237 = vpop.f32.mrb[0].mxu0
    %v1238 = vadd.f32 %v1077, %v1237
    %v1239 = vpop.f32.mrb[0].mxu0
    %v1240 = vadd.f32 %v1079, %v1239
    %1241 = vmatprep.mubr.f32.mxu0 0.0
    %1242 = vmatmul.mubr.f32.gmra.mrb[0].mxu0 %v623
    %v1243 = vpop.f32.mrb[0].mxu0
    %v1244 = vadd.f32 %v1083, %v1243
    %v1245 = vpop.f32.mrb[0].mxu0
    %v1246 = vadd.f32 %v1085, %v1245
    %1247 = vmatprep.mubr.f32.mxu0 0.0
    %1248 = vmatmul.mubr.f32.gmra.mrb[0].mxu0 %v626
    %v1249 = vpop.f32.mrb[0].mxu0
    %v1250 = vadd.f32 %v1089, %v1249
    %v1251 = vpop.f32.mrb[0].mxu0
    %v1252 = vadd.f32 %v1091, %v1251
    %1253 = vmatprep.mubr.f32.mxu0 0.0
    %1254 = vmatmul.mubr.f32.gmra.mrb[0].mxu0 %v629
    %v1255 = vpop.f32.mrb[0].mxu0
    %v1256 = vadd.f32 %v1095, %v1255
    %v1257 = vpop.f32.mrb[0].mxu0
    %v1258 = vadd.f32 %v1097, %v1257
    %1259 = vmatprep.mubr.f32.mxu0 0.0
    %1260 = vmatmul.mubr.f32.gmra.mrb[0].mxu0 %v632
    %v1261 = vpop.f32.mrb[0].mxu0
    %v1262 = vadd.f32 %v1101, %v1261
    %v1263 = vpop.f32.mrb[0].mxu0
    %v1264 = vadd.f32 %v1103, %v1263
    %1265 = vmatprep.mubr.f32.mxu0 0.0
    %1266 = vmatmul.mubr.f32.gmra.mrb[0].mxu0 %v635
    %v1267 = vpop.f32.mrb[0].mxu0
    %v1268 = vadd.f32 %v1107, %v1267
    %v1269 = vpop.f32.mrb[0].mxu0
    %v1270 = vadd.f32 %v1109, %v1269
    %1271 = vmatprep.mubr.f32.mxu0 0.0
    %1272 = vmatmul.mubr.f32.gmra.mrb[0].mxu0 %v638
    %v1273 = vpop.f32.mrb[0].mxu0
    %v1274 = vadd.f32 %v1113, %v1273
    %v1275 = vpop.f32.mrb[0].mxu0
    %v1276 = vadd.f32 %v1115, %v1275
    %1277 = vmatprep.mubr.f32.mxu0 0.0
    %1278 = vmatmul.mubr.f32.gmra.mrb[0].mxu0 %v641
    %v1279 = vpop.f32.mrb[0].mxu0
    %v1280 = vadd.f32 %v1119, %v1279
    %v1281 = vpop.f32.mrb[0].mxu0
    %v1282 = vadd.f32 %v1121, %v1281
    %1283 = vmatprep.mubr.f32.mxu0 0.0
    %1284 = vmatmul.mubr.f32.gmra.mrb[0].mxu0 %v644
    %v1285 = vpop.f32.mrb[0].mxu0
    %v1286 = vadd.f32 %v1125, %v1285
    %v1287 = vpop.f32.mrb[0].mxu0
    %v1288 = vadd.f32 %v1127, %v1287
    %1289 = vdwg.mxu0
    %1290 = vmatprep.subr.mxu0 %v186
    %1291 = vmatpush1.msra.mxu0 %v185
    %1292 = vmatprep.subr.mxu0 %v190
    %1293 = vmatpush1.msra.mxu0 %v189
    %1294 = vmatprep.subr.mxu0 %v194
    %1295 = vmatpush1.msra.mxu0 %v193
    %1296 = vmatprep.subr.mxu0 %v198
    %1297 = vmatpush1.msra.mxu0 %v197
    %1298 = vmatprep.subr.mxu0 %v202
    %1299 = vmatpush1.msra.mxu0 %v201
    %1300 = vmatprep.subr.mxu0 %v206
    %1301 = vmatpush1.msra.mxu0 %v205
    %1302 = vmatprep.subr.mxu0 %v210
    %1303 = vmatpush1.msra.mxu0 %v209
    %1304 = vmatprep.subr.mxu0 %v214
    %1305 = vmatpush1.msra.mxu0 %v213
    %1306 = vmatprep.subr.mxu0 %v218
    %1307 = vmatpush1.msra.mxu0 %v217
    %1308 = vmatprep.subr.mxu0 %v222
    %1309 = vmatpush1.msra.mxu0 %v221
    %1310 = vmatprep.subr.mxu0 %v226
    %1311 = vmatpush1.msra.mxu0 %v225
    %1312 = vmatprep.subr.mxu0 %v230
    %1313 = vmatpush1.msra.mxu0 %v229
    %1314 = vmatprep.subr.mxu0 %v234
    %1315 = vmatpush1.msra.mxu0 %v233
    %1316 = vmatprep.subr.mxu0 %v238
    %1317 = vmatpush1.msra.mxu0 %v237
    %1318 = vmatprep.subr.mxu0 %v242
    %1319 = vmatpush1.msra.mxu0 %v241
    %1320 = vmatprep.subr.mxu0 %v246
    %1321 = vmatpush1.msra.mxu0 %v245
    %1322 = vmatprep.subr.mxu0 %v250
    %1323 = vmatpush1.msra.mxu0 %v249
    %1324 = vmatprep.subr.mxu0 %v254
    %1325 = vmatpush1.msra.mxu0 %v253
    %1326 = vmatprep.subr.mxu0 %v258
    %1327 = vmatpush1.msra.mxu0 %v257
    %1328 = vmatprep.subr.mxu0 %v262
    %1329 = vmatpush1.msra.mxu0 %v261
    %1330 = vmatprep.subr.mxu0 %v266
    %1331 = vmatpush1.msra.mxu0 %v265
    %1332 = vmatprep.subr.mxu0 %v270
    %1333 = vmatpush1.msra.mxu0 %v269
    %1334 = vmatprep.subr.mxu0 %v274
    %1335 = vmatpush1.msra.mxu0 %v273
    %1336 = vmatprep.subr.mxu0 %v278
    %1337 = vmatpush1.msra.mxu0 %v277
    %1338 = vmatprep.subr.mxu0 %v282
    %1339 = vmatpush1.msra.mxu0 %v281
    %1340 = vmatprep.subr.mxu0 %v286
    %1341 = vmatpush1.msra.mxu0 %v285
    %1342 = vmatprep.subr.mxu0 %v290
    %1343 = vmatpush1.msra.mxu0 %v289
    %1344 = vmatprep.subr.mxu0 %v294
    %1345 = vmatpush1.msra.mxu0 %v293
    %1346 = vmatprep.subr.mxu0 %v298
    %1347 = vmatpush1.msra.mxu0 %v297
    %1348 = vmatprep.subr.mxu0 %v302
    %1349 = vmatpush1.msra.mxu0 %v301
    %1350 = vmatprep.subr.mxu0 %v306
    %1351 = vmatpush1.msra.mxu0 %v305
    %1352 = vmatprep.subr.mxu0 %v310
    %1353 = vmatpush1.msra.mxu0 %v309
    %1354 = vmatprep.mubr.f32.mxu0 %v72
    %1355 = vmatmul.mubr.f32.gmra.mrb[0].mxu0 %v71
    %v1356 = vpop.f32.mrb[0].mxu0
    %v1357 = vadd.f32 %v588, %v1356
    %v1358 = vpop.f32.mrb[0].mxu0
    %v1359 = vadd.f32 %v592, %v1358
    %1360 = vmatprep.mubr.f32.mxu0 %v79
    %1361 = vmatmul.mubr.f32.gmra.mrb[0].mxu0 %v78
    %v1362 = vpop.f32.mrb[0].mxu0
    %v1363 = vadd.f32 %v588, %v1362
    %v1364 = vpop.f32.mrb[0].mxu0
    %v1365 = vadd.f32 %v592, %v1364
    %1366 = vmatprep.mubr.f32.mxu0 %v86
    %1367 = vmatmul.mubr.f32.gmra.mrb[0].mxu0 %v85
    %v1368 = vpop.f32.mrb[0].mxu0
    %v1369 = vadd.f32 %v588, %v1368
    %v1370 = vpop.f32.mrb[0].mxu0
    %v1371 = vadd.f32 %v592, %v1370
    %1372 = vmatprep.mubr.f32.mxu0 %v93
    %1373 = vmatmul.mubr.f32.gmra.mrb[0].mxu0 %v92
    %v1374 = vpop.f32.mrb[0].mxu0
    %v1375 = vadd.f32 %v588, %v1374
    %v1376 = vpop.f32.mrb[0].mxu0
    %v1377 = vadd.f32 %v592, %v1376
    %1378 = vmatprep.mubr.f32.mxu0 %v100
    %1379 = vmatmul.mubr.f32.gmra.mrb[0].mxu0 %v99
    %v1380 = vpop.f32.mrb[0].mxu0
    %v1381 = vadd.f32 %v588, %v1380
    %v1382 = vpop.f32.mrb[0].mxu0
    %v1383 = vadd.f32 %v592, %v1382
    %1384 = vmatprep.mubr.f32.mxu0 %v107
    %1385 = vmatmul.mubr.f32.gmra.mrb[0].mxu0 %v106
    %v1386 = vpop.f32.mrb[0].mxu0
    %v1387 = vadd.f32 %v588, %v1386
    %v1388 = vpop.f32.mrb[0].mxu0
    %v1389 = vadd.f32 %v592, %v1388
    %1390 = vmatprep.mubr.f32.mxu0 %v114
    %1391 = vmatmul.mubr.f32.gmra.mrb[0].mxu0 %v113
    %v1392 = vpop.f32.mrb[0].mxu0
    %v1393 = vadd.f32 %v588, %v1392
    %v1394 = vpop.f32.mrb[0].mxu0
    %v1395 = vadd.f32 %v592, %v1394
    %1396 = vmatprep.mubr.f32.mxu0 %v121
    %1397 = vmatmul.mubr.f32.gmra.mrb[0].mxu0 %v120
    %v1398 = vpop.f32.mrb[0].mxu0
    %v1399 = vadd.f32 %v588, %v1398
    %v1400 = vpop.f32.mrb[0].mxu0
    %v1401 = vadd.f32 %v592, %v1400
    %1402 = vmatprep.mubr.f32.mxu0 %v128
    %1403 = vmatmul.mubr.f32.gmra.mrb[0].mxu0 %v127
    %v1404 = vpop.f32.mrb[0].mxu0
    %v1405 = vadd.f32 %v588, %v1404
    %v1406 = vpop.f32.mrb[0].mxu0
    %v1407 = vadd.f32 %v592, %v1406
    %1408 = vmatprep.mubr.f32.mxu0 %v135
    %1409 = vmatmul.mubr.f32.gmra.mrb[0].mxu0 %v134
    %v1410 = vpop.f32.mrb[0].mxu0
    %v1411 = vadd.f32 %v588, %v1410
    %v1412 = vpop.f32.mrb[0].mxu0
    %v1413 = vadd.f32 %v592, %v1412
    %1414 = vmatprep.mubr.f32.mxu0 %v142
    %1415 = vmatmul.mubr.f32.gmra.mrb[0].mxu0 %v141
    %v1416 = vpop.f32.mrb[0].mxu0
    %v1417 = vadd.f32 %v588, %v1416
    %v1418 = vpop.f32.mrb[0].mxu0
    %v1419 = vadd.f32 %v592, %v1418
    %1420 = vmatprep.mubr.f32.mxu0 %v149
    %1421 = vmatmul.mubr.f32.gmra.mrb[0].mxu0 %v148
    %v1422 = vpop.f32.mrb[0].mxu0
    %v1423 = vadd.f32 %v588, %v1422
    %v1424 = vpop.f32.mrb[0].mxu0
    %v1425 = vadd.f32 %v592, %v1424
    %1426 = vmatprep.mubr.f32.mxu0 %v156
    %1427 = vmatmul.mubr.f32.gmra.mrb[0].mxu0 %v155
    %v1428 = vpop.f32.mrb[0].mxu0
    %v1429 = vadd.f32 %v588, %v1428
    %v1430 = vpop.f32.mrb[0].mxu0
    %v1431 = vadd.f32 %v592, %v1430
    %1432 = vmatprep.mubr.f32.mxu0 %v163
    %1433 = vmatmul.mubr.f32.gmra.mrb[0].mxu0 %v162
    %v1434 = vpop.f32.mrb[0].mxu0
    %v1435 = vadd.f32 %v588, %v1434
    %v1436 = vpop.f32.mrb[0].mxu0
    %v1437 = vadd.f32 %v592, %v1436
    %1438 = vmatprep.mubr.f32.mxu0 %v170
    %1439 = vmatmul.mubr.f32.gmra.mrb[0].mxu0 %v169
    %v1440 = vpop.f32.mrb[0].mxu0
    %v1441 = vadd.f32 %v588, %v1440
    %v1442 = vpop.f32.mrb[0].mxu0
    %v1443 = vadd.f32 %v592, %v1442
    %1444 = vmatprep.mubr.f32.mxu0 %v177
    %1445 = vmatmul.mubr.f32.gmra.mrb[0].mxu0 %v176
    %v1446 = vpop.f32.mrb[0].mxu0
    %v1447 = vadd.f32 %v588, %v1446
    %v1448 = vpop.f32.mrb[0].mxu0
    %v1449 = vadd.f32 %v592, %v1448
    %1450 = vdwg.mxu0
    %1451 = vmatprep.subr.mxu0 %v314
    %1452 = vmatpush1.msra.mxu0 %v313
    %1453 = vmatprep.subr.mxu0 %v318
    %1454 = vmatpush1.msra.mxu0 %v317
    %1455 = vmatprep.subr.mxu0 %v322
    %1456 = vmatpush1.msra.mxu0 %v321
    %1457 = vmatprep.subr.mxu0 %v326
    %1458 = vmatpush1.msra.mxu0 %v325
    %1459 = vmatprep.subr.mxu0 %v330
    %1460 = vmatpush1.msra.mxu0 %v329
    %1461 = vmatprep.subr.mxu0 %v334
    %1462 = vmatpush1.msra.mxu0 %v333
    %1463 = vmatprep.subr.mxu0 %v338
    %1464 = vmatpush1.msra.mxu0 %v337
    %1465 = vmatprep.subr.mxu0 %v342
    %1466 = vmatpush1.msra.mxu0 %v341
    %1467 = vmatprep.subr.mxu0 %v346
    %1468 = vmatpush1.msra.mxu0 %v345
    %1469 = vmatprep.subr.mxu0 %v350
    %1470 = vmatpush1.msra.mxu0 %v349
    %1471 = vmatprep.subr.mxu0 %v354
    %1472 = vmatpush1.msra.mxu0 %v353
    %1473 = vmatprep.subr.mxu0 %v358
    %1474 = vmatpush1.msra.mxu0 %v357
    %1475 = vmatprep.subr.mxu0 %v362
    %1476 = vmatpush1.msra.mxu0 %v361
    %1477 = vmatprep.subr.mxu0 %v366
    %1478 = vmatpush1.msra.mxu0 %v365
    %1479 = vmatprep.subr.mxu0 %v370
    %1480 = vmatpush1.msra.mxu0 %v369
    %1481 = vmatprep.subr.mxu0 %v374
    %1482 = vmatpush1.msra.mxu0 %v373
    %1483 = vmatprep.subr.mxu0 %v378
    %1484 = vmatpush1.msra.mxu0 %v377
    %1485 = vmatprep.subr.mxu0 %v382
    %1486 = vmatpush1.msra.mxu0 %v381
    %1487 = vmatprep.subr.mxu0 %v386
    %1488 = vmatpush1.msra.mxu0 %v385
    %1489 = vmatprep.subr.mxu0 %v390
    %1490 = vmatpush1.msra.mxu0 %v389
    %1491 = vmatprep.subr.mxu0 %v394
    %1492 = vmatpush1.msra.mxu0 %v393
    %1493 = vmatprep.subr.mxu0 %v398
    %1494 = vmatpush1.msra.mxu0 %v397
    %1495 = vmatprep.subr.mxu0 %v402
    %1496 = vmatpush1.msra.mxu0 %v401
    %1497 = vmatprep.subr.mxu0 %v406
    %1498 = vmatpush1.msra.mxu0 %v405
    %1499 = vmatprep.subr.mxu0 %v410
    %1500 = vmatpush1.msra.mxu0 %v409
    %1501 = vmatprep.subr.mxu0 %v414
    %1502 = vmatpush1.msra.mxu0 %v413
    %1503 = vmatprep.subr.mxu0 %v418
    %1504 = vmatpush1.msra.mxu0 %v417
    %1505 = vmatprep.subr.mxu0 %v422
    %1506 = vmatpush1.msra.mxu0 %v421
    %1507 = vmatprep.subr.mxu0 %v426
    %1508 = vmatpush1.msra.mxu0 %v425
    %1509 = vmatprep.subr.mxu0 %v430
    %1510 = vmatpush1.msra.mxu0 %v429
    %1511 = vmatprep.subr.mxu0 %v434
    %1512 = vmatpush1.msra.mxu0 %v433
    %1513 = vmatprep.subr.mxu0 %v438
    %1514 = vmatpush1.msra.mxu0 %v437
    %1515 = vmatprep.mubr.f32.mxu0 %v74
    %1516 = vmatmul.mubr.f32.gmra.mrb[0].mxu0 %v73
    %v1517 = vpop.f32.mrb[0].mxu0
    %v1518 = vadd.f32 %v1357, %v1517
    %v1519 = vpop.f32.mrb[0].mxu0
    %v1520 = vadd.f32 %v1359, %v1519
    %1521 = vmatprep.mubr.f32.mxu0 %v81
    %1522 = vmatmul.mubr.f32.gmra.mrb[0].mxu0 %v80
    %v1523 = vpop.f32.mrb[0].mxu0
    %v1524 = vadd.f32 %v1363, %v1523
    %v1525 = vpop.f32.mrb[0].mxu0
    %v1526 = vadd.f32 %v1365, %v1525
    %1527 = vmatprep.mubr.f32.mxu0 %v88
    %1528 = vmatmul.mubr.f32.gmra.mrb[0].mxu0 %v87
    %v1529 = vpop.f32.mrb[0].mxu0
    %v1530 = vadd.f32 %v1369, %v1529
    %v1531 = vpop.f32.mrb[0].mxu0
    %v1532 = vadd.f32 %v1371, %v1531
    %1533 = vmatprep.mubr.f32.mxu0 %v95
    %1534 = vmatmul.mubr.f32.gmra.mrb[0].mxu0 %v94
    %v1535 = vpop.f32.mrb[0].mxu0
    %v1536 = vadd.f32 %v1375, %v1535
    %v1537 = vpop.f32.mrb[0].mxu0
    %v1538 = vadd.f32 %v1377, %v1537
    %1539 = vmatprep.mubr.f32.mxu0 %v102
    %1540 = vmatmul.mubr.f32.gmra.mrb[0].mxu0 %v101
    %v1541 = vpop.f32.mrb[0].mxu0
    %v1542 = vadd.f32 %v1381, %v1541
    %v1543 = vpop.f32.mrb[0].mxu0
    %v1544 = vadd.f32 %v1383, %v1543
    %1545 = vmatprep.mubr.f32.mxu0 %v109
    %1546 = vmatmul.mubr.f32.gmra.mrb[0].mxu0 %v108
    %v1547 = vpop.f32.mrb[0].mxu0
    %v1548 = vadd.f32 %v1387, %v1547
    %v1549 = vpop.f32.mrb[0].mxu0
    %v1550 = vadd.f32 %v1389, %v1549
    %1551 = vmatprep.mubr.f32.mxu0 %v116
    %1552 = vmatmul.mubr.f32.gmra.mrb[0].mxu0 %v115
    %v1553 = vpop.f32.mrb[0].mxu0
    %v1554 = vadd.f32 %v1393, %v1553
    %v1555 = vpop.f32.mrb[0].mxu0
    %v1556 = vadd.f32 %v1395, %v1555
    %1557 = vmatprep.mubr.f32.mxu0 %v123
    %1558 = vmatmul.mubr.f32.gmra.mrb[0].mxu0 %v122
    %v1559 = vpop.f32.mrb[0].mxu0
    %v1560 = vadd.f32 %v1399, %v1559
    %v1561 = vpop.f32.mrb[0].mxu0
    %v1562 = vadd.f32 %v1401, %v1561
    %1563 = vmatprep.mubr.f32.mxu0 %v130
    %1564 = vmatmul.mubr.f32.gmra.mrb[0].mxu0 %v129
    %v1565 = vpop.f32.mrb[0].mxu0
    %v1566 = vadd.f32 %v1405, %v1565
    %v1567 = vpop.f32.mrb[0].mxu0
    %v1568 = vadd.f32 %v1407, %v1567
    %1569 = vmatprep.mubr.f32.mxu0 %v137
    %1570 = vmatmul.mubr.f32.gmra.mrb[0].mxu0 %v136
    %v1571 = vpop.f32.mrb[0].mxu0
    %v1572 = vadd.f32 %v1411, %v1571
    %v1573 = vpop.f32.mrb[0].mxu0
    %v1574 = vadd.f32 %v1413, %v1573
    %1575 = vmatprep.mubr.f32.mxu0 %v144
    %1576 = vmatmul.mubr.f32.gmra.mrb[0].mxu0 %v143
    %v1577 = vpop.f32.mrb[0].mxu0
    %v1578 = vadd.f32 %v1417, %v1577
    %v1579 = vpop.f32.mrb[0].mxu0
    %v1580 = vadd.f32 %v1419, %v1579
    %1581 = vmatprep.mubr.f32.mxu0 %v151
    %1582 = vmatmul.mubr.f32.gmra.mrb[0].mxu0 %v150
    %v1583 = vpop.f32.mrb[0].mxu0
    %v1584 = vadd.f32 %v1423, %v1583
    %v1585 = vpop.f32.mrb[0].mxu0
    %v1586 = vadd.f32 %v1425, %v1585
    %1587 = vmatprep.mubr.f32.mxu0 %v158
    %1588 = vmatmul.mubr.f32.gmra.mrb[0].mxu0 %v157
    %v1589 = vpop.f32.mrb[0].mxu0
    %v1590 = vadd.f32 %v1429, %v1589
    %v1591 = vpop.f32.mrb[0].mxu0
    %v1592 = vadd.f32 %v1431, %v1591
    %1593 = vmatprep.mubr.f32.mxu0 %v165
    %1594 = vmatmul.mubr.f32.gmra.mrb[0].mxu0 %v164
    %v1595 = vpop.f32.mrb[0].mxu0
    %v1596 = vadd.f32 %v1435, %v1595
    %v1597 = vpop.f32.mrb[0].mxu0
    %v1598 = vadd.f32 %v1437, %v1597
    %1599 = vmatprep.mubr.f32.mxu0 %v172
    %1600 = vmatmul.mubr.f32.gmra.mrb[0].mxu0 %v171
    %v1601 = vpop.f32.mrb[0].mxu0
    %v1602 = vadd.f32 %v1441, %v1601
    %v1603 = vpop.f32.mrb[0].mxu0
    %v1604 = vadd.f32 %v1443, %v1603
    %1605 = vmatprep.mubr.f32.mxu0 %v179
    %1606 = vmatmul.mubr.f32.gmra.mrb[0].mxu0 %v178
    %v1607 = vpop.f32.mrb[0].mxu0
    %v1608 = vadd.f32 %v1447, %v1607
    %v1609 = vpop.f32.mrb[0].mxu0
    %v1610 = vadd.f32 %v1449, %v1609
    %1611 = vdwg.mxu0
    %1612 = vmatprep.subr.mxu0 %v442
    %1613 = vmatpush1.msra.mxu0 %v441
    %1614 = vmatprep.subr.mxu0 %v446
    %1615 = vmatpush1.msra.mxu0 %v445
    %1616 = vmatprep.subr.mxu0 %v450
    %1617 = vmatpush1.msra.mxu0 %v449
    %1618 = vmatprep.subr.mxu0 %v454
    %1619 = vmatpush1.msra.mxu0 %v453
    %1620 = vmatprep.subr.mxu0 %v458
    %1621 = vmatpush1.msra.mxu0 %v457
    %1622 = vmatprep.subr.mxu0 %v462
    %1623 = vmatpush1.msra.mxu0 %v461
    %1624 = vmatprep.subr.mxu0 %v466
    %1625 = vmatpush1.msra.mxu0 %v465
    %1626 = vmatprep.subr.mxu0 %v470
    %1627 = vmatpush1.msra.mxu0 %v469
    %1628 = vmatprep.subr.mxu0 %v474
    %1629 = vmatpush1.msra.mxu0 %v473
    %1630 = vmatprep.subr.mxu0 %v478
    %1631 = vmatpush1.msra.mxu0 %v477
    %1632 = vmatprep.subr.mxu0 %v482
    %1633 = vmatpush1.msra.mxu0 %v481
    %1634 = vmatprep.subr.mxu0 %v486
    %1635 = vmatpush1.msra.mxu0 %v485
    %1636 = vmatprep.subr.mxu0 %v490
    %1637 = vmatpush1.msra.mxu0 %v489
    %1638 = vmatprep.subr.mxu0 %v494
    %1639 = vmatpush1.msra.mxu0 %v493
    %1640 = vmatprep.subr.mxu0 %v498
    %1641 = vmatpush1.msra.mxu0 %v497
    %1642 = vmatprep.subr.mxu0 %v502
    %1643 = vmatpush1.msra.mxu0 %v501
    %1644 = vmatprep.subr.mxu0 %v506
    %1645 = vmatpush1.msra.mxu0 %v505
    %1646 = vmatprep.subr.mxu0 %v510
    %1647 = vmatpush1.msra.mxu0 %v509
    %1648 = vmatprep.subr.mxu0 %v514
    %1649 = vmatpush1.msra.mxu0 %v513
    %1650 = vmatprep.subr.mxu0 %v518
    %1651 = vmatpush1.msra.mxu0 %v517
    %1652 = vmatprep.subr.mxu0 %v522
    %1653 = vmatpush1.msra.mxu0 %v521
    %1654 = vmatprep.subr.mxu0 %v526
    %1655 = vmatpush1.msra.mxu0 %v525
    %1656 = vmatprep.subr.mxu0 %v530
    %1657 = vmatpush1.msra.mxu0 %v529
    %1658 = vmatprep.subr.mxu0 %v534
    %1659 = vmatpush1.msra.mxu0 %v533
    %1660 = vmatprep.subr.mxu0 %v538
    %1661 = vmatpush1.msra.mxu0 %v537
    %1662 = vmatprep.subr.mxu0 %v542
    %1663 = vmatpush1.msra.mxu0 %v541
    %1664 = vmatprep.subr.mxu0 %v546
    %1665 = vmatpush1.msra.mxu0 %v545
    %1666 = vmatprep.subr.mxu0 %v550
    %1667 = vmatpush1.msra.mxu0 %v549
    %1668 = vmatprep.subr.mxu0 %v554
    %1669 = vmatpush1.msra.mxu0 %v553
    %1670 = vmatprep.subr.mxu0 %v558
    %1671 = vmatpush1.msra.mxu0 %v557
    %1672 = vmatprep.subr.mxu0 %v562
    %1673 = vmatpush1.msra.mxu0 %v561
    %1674 = vmatprep.subr.mxu0 %v566
    %1675 = vmatpush1.msra.mxu0 %v565
    %1676 = vmatprep.mubr.f32.mxu0 %v76
    %1677 = vmatmul.mubr.f32.gmra.mrb[0].mxu0 %v75
    %v1678 = vpop.f32.mrb[0].mxu0
    %v1679 = vadd.f32 %v1518, %v1678
    %v1680 = vpop.f32.mrb[0].mxu0
    %v1681 = vadd.f32 %v1520, %v1680
    %1682 = vmatprep.mubr.f32.mxu0 %v83
    %1683 = vmatmul.mubr.f32.gmra.mrb[0].mxu0 %v82
    %v1684 = vpop.f32.mrb[0].mxu0
    %v1685 = vadd.f32 %v1524, %v1684
    %v1686 = vpop.f32.mrb[0].mxu0
    %v1687 = vadd.f32 %v1526, %v1686
    %1688 = vmatprep.mubr.f32.mxu0 %v90
    %1689 = vmatmul.mubr.f32.gmra.mrb[0].mxu0 %v89
    %v1690 = vpop.f32.mrb[0].mxu0
    %v1691 = vadd.f32 %v1530, %v1690
    %v1692 = vpop.f32.mrb[0].mxu0
    %v1693 = vadd.f32 %v1532, %v1692
    %1694 = vmatprep.mubr.f32.mxu0 %v97
    %1695 = vmatmul.mubr.f32.gmra.mrb[0].mxu0 %v96
    %v1696 = vpop.f32.mrb[0].mxu0
    %v1697 = vadd.f32 %v1536, %v1696
    %v1698 = vpop.f32.mrb[0].mxu0
    %v1699 = vadd.f32 %v1538, %v1698
    %1700 = vmatprep.mubr.f32.mxu0 %v104
    %1701 = vmatmul.mubr.f32.gmra.mrb[0].mxu0 %v103
    %v1702 = vpop.f32.mrb[0].mxu0
    %v1703 = vadd.f32 %v1542, %v1702
    %v1704 = vpop.f32.mrb[0].mxu0
    %v1705 = vadd.f32 %v1544, %v1704
    %1706 = vmatprep.mubr.f32.mxu0 %v111
    %1707 = vmatmul.mubr.f32.gmra.mrb[0].mxu0 %v110
    %v1708 = vpop.f32.mrb[0].mxu0
    %v1709 = vadd.f32 %v1548, %v1708
    %v1710 = vpop.f32.mrb[0].mxu0
    %v1711 = vadd.f32 %v1550, %v1710
    %1712 = vmatprep.mubr.f32.mxu0 %v118
    %1713 = vmatmul.mubr.f32.gmra.mrb[0].mxu0 %v117
    %v1714 = vpop.f32.mrb[0].mxu0
    %v1715 = vadd.f32 %v1554, %v1714
    %v1716 = vpop.f32.mrb[0].mxu0
    %v1717 = vadd.f32 %v1556, %v1716
    %1718 = vmatprep.mubr.f32.mxu0 %v125
    %1719 = vmatmul.mubr.f32.gmra.mrb[0].mxu0 %v124
    %v1720 = vpop.f32.mrb[0].mxu0
    %v1721 = vadd.f32 %v1560, %v1720
    %v1722 = vpop.f32.mrb[0].mxu0
    %v1723 = vadd.f32 %v1562, %v1722
    %1724 = vmatprep.mubr.f32.mxu0 %v132
    %1725 = vmatmul.mubr.f32.gmra.mrb[0].mxu0 %v131
    %v1726 = vpop.f32.mrb[0].mxu0
    %v1727 = vadd.f32 %v1566, %v1726
    %v1728 = vpop.f32.mrb[0].mxu0
    %v1729 = vadd.f32 %v1568, %v1728
    %1730 = vmatprep.mubr.f32.mxu0 %v139
    %1731 = vmatmul.mubr.f32.gmra.mrb[0].mxu0 %v138
    %v1732 = vpop.f32.mrb[0].mxu0
    %v1733 = vadd.f32 %v1572, %v1732
    %v1734 = vpop.f32.mrb[0].mxu0
    %v1735 = vadd.f32 %v1574, %v1734
    %1736 = vmatprep.mubr.f32.mxu0 %v146
    %1737 = vmatmul.mubr.f32.gmra.mrb[0].mxu0 %v145
    %v1738 = vpop.f32.mrb[0].mxu0
    %v1739 = vadd.f32 %v1578, %v1738
    %v1740 = vpop.f32.mrb[0].mxu0
    %v1741 = vadd.f32 %v1580, %v1740
    %1742 = vmatprep.mubr.f32.mxu0 %v153
    %1743 = vmatmul.mubr.f32.gmra.mrb[0].mxu0 %v152
    %v1744 = vpop.f32.mrb[0].mxu0
    %v1745 = vadd.f32 %v1584, %v1744
    %v1746 = vpop.f32.mrb[0].mxu0
    %v1747 = vadd.f32 %v1586, %v1746
    %1748 = vmatprep.mubr.f32.mxu0 %v160
    %1749 = vmatmul.mubr.f32.gmra.mrb[0].mxu0 %v159
    %v1750 = vpop.f32.mrb[0].mxu0
    %v1751 = vadd.f32 %v1590, %v1750
    %v1752 = vpop.f32.mrb[0].mxu0
    %v1753 = vadd.f32 %v1592, %v1752
    %1754 = vmatprep.mubr.f32.mxu0 %v167
    %1755 = vmatmul.mubr.f32.gmra.mrb[0].mxu0 %v166
    %v1756 = vpop.f32.mrb[0].mxu0
    %v1757 = vadd.f32 %v1596, %v1756
    %v1758 = vpop.f32.mrb[0].mxu0
    %v1759 = vadd.f32 %v1598, %v1758
    %1760 = vmatprep.mubr.f32.mxu0 %v174
    %1761 = vmatmul.mubr.f32.gmra.mrb[0].mxu0 %v173
    %v1762 = vpop.f32.mrb[0].mxu0
    %v1763 = vadd.f32 %v1602, %v1762
    %v1764 = vpop.f32.mrb[0].mxu0
    %v1765 = vadd.f32 %v1604, %v1764
    %1766 = vmatprep.mubr.f32.mxu0 %v181
    %1767 = vmatmul.mubr.f32.gmra.mrb[0].mxu0 %v180
    %v1768 = vpop.f32.mrb[0].mxu0
    %v1769 = vadd.f32 %v1608, %v1768
    %v1770 = vpop.f32.mrb[0].mxu0
    %v1771 = vadd.f32 %v1610, %v1770
    %1772 = vdwg.mxu0
    %1773 = vmatprep.subr.mxu0 %v570
    %1774 = vmatpush1.msra.mxu0 %v569
    %1775 = vmatprep.subr.mxu0 %v574
    %1776 = vmatpush1.msra.mxu0 %v573
    %1777 = vmatprep.subr.mxu0 0.0
    %1778 = vmatpush1.msra.mxu0 0.0
    %1779 = vmatprep.subr.mxu0 0.0
    %1780 = vmatpush1.msra.mxu0 0.0
    %1781 = vmatprep.subr.mxu0 0.0
    %1782 = vmatpush1.msra.mxu0 0.0
    %1783 = vmatprep.subr.mxu0 0.0
    %1784 = vmatpush1.msra.mxu0 0.0
    %1785 = vmatprep.subr.mxu0 0.0
    %1786 = vmatpush1.msra.mxu0 0.0
    %1787 = vmatprep.subr.mxu0 0.0
    %1788 = vmatpush1.msra.mxu0 0.0
    %1789 = vmatprep.subr.mxu0 0.0
    %1790 = vmatpush1.msra.mxu0 0.0
    %1791 = vmatprep.subr.mxu0 0.0
    %1792 = vmatpush1.msra.mxu0 0.0
    %1793 = vmatprep.subr.mxu0 0.0
    %1794 = vmatpush1.msra.mxu0 0.0
    %1795 = vmatprep.subr.mxu0 0.0
    %1796 = vmatpush1.msra.mxu0 0.0
    %1797 = vmatprep.subr.mxu0 0.0
    %1798 = vmatpush1.msra.mxu0 0.0
    %1799 = vmatprep.subr.mxu0 0.0
    %1800 = vmatpush1.msra.mxu0 0.0
    %1801 = vmatprep.subr.mxu0 0.0
    %1802 = vmatpush1.msra.mxu0 0.0
    %1803 = vmatprep.subr.mxu0 0.0
    %1804 = vmatpush1.msra.mxu0 0.0
    %1805 = vmatprep.subr.mxu0 0.0
    %1806 = vmatpush1.msra.mxu0 0.0
    %1807 = vmatprep.subr.mxu0 0.0
    %1808 = vmatpush1.msra.mxu0 0.0
    %1809 = vmatprep.subr.mxu0 0.0
    %1810 = vmatpush1.msra.mxu0 0.0
    %1811 = vmatprep.subr.mxu0 0.0
    %1812 = vmatpush1.msra.mxu0 0.0
    %1813 = vmatprep.subr.mxu0 0.0
    %1814 = vmatpush1.msra.mxu0 0.0
    %1815 = vmatprep.subr.mxu0 0.0
    %1816 = vmatpush1.msra.mxu0 0.0
    %1817 = vmatprep.subr.mxu0 0.0
    %1818 = vmatpush1.msra.mxu0 0.0
    %1819 = vmatprep.subr.mxu0 0.0
    %1820 = vmatpush1.msra.mxu0 0.0
    %1821 = vmatprep.subr.mxu0 0.0
    %1822 = vmatpush1.msra.mxu0 0.0
    %1823 = vmatprep.subr.mxu0 0.0
    %1824 = vmatpush1.msra.mxu0 0.0
    %1825 = vmatprep.subr.mxu0 0.0
    %1826 = vmatpush1.msra.mxu0 0.0
    %1827 = vmatprep.subr.mxu0 0.0
    %1828 = vmatpush1.msra.mxu0 0.0
    %1829 = vmatprep.subr.mxu0 0.0
    %1830 = vmatpush1.msra.mxu0 0.0
    %1831 = vmatprep.subr.mxu0 0.0
    %1832 = vmatpush1.msra.mxu0 0.0
    %1833 = vmatprep.subr.mxu0 0.0
    %1834 = vmatpush1.msra.mxu0 0.0
    %1835 = vmatprep.subr.mxu0 0.0
    %1836 = vmatpush1.msra.mxu0 0.0
    %1837 = vmatprep.mubr.f32.mxu0 0.0
    %1838 = vmatmul.mubr.f32.gmra.mrb[0].mxu0 %v599
    %v1839 = vpop.f32.mrb[0].mxu0
    %v1840 = vadd.f32 %v1679, %v1839
    %v1841 = vpop.f32.mrb[0].mxu0
    %v1842 = vadd.f32 %v1681, %v1841
    %1843 = vmatprep.mubr.f32.mxu0 0.0
    %1844 = vmatmul.mubr.f32.gmra.mrb[0].mxu0 %v602
    %v1845 = vpop.f32.mrb[0].mxu0
    %v1846 = vadd.f32 %v1685, %v1845
    %v1847 = vpop.f32.mrb[0].mxu0
    %v1848 = vadd.f32 %v1687, %v1847
    %1849 = vmatprep.mubr.f32.mxu0 0.0
    %1850 = vmatmul.mubr.f32.gmra.mrb[0].mxu0 %v605
    %v1851 = vpop.f32.mrb[0].mxu0
    %v1852 = vadd.f32 %v1691, %v1851
    %v1853 = vpop.f32.mrb[0].mxu0
    %v1854 = vadd.f32 %v1693, %v1853
    %1855 = vmatprep.mubr.f32.mxu0 0.0
    %1856 = vmatmul.mubr.f32.gmra.mrb[0].mxu0 %v608
    %v1857 = vpop.f32.mrb[0].mxu0
    %v1858 = vadd.f32 %v1697, %v1857
    %v1859 = vpop.f32.mrb[0].mxu0
    %v1860 = vadd.f32 %v1699, %v1859
    %1861 = vmatprep.mubr.f32.mxu0 0.0
    %1862 = vmatmul.mubr.f32.gmra.mrb[0].mxu0 %v611
    %v1863 = vpop.f32.mrb[0].mxu0
    %v1864 = vadd.f32 %v1703, %v1863
    %v1865 = vpop.f32.mrb[0].mxu0
    %v1866 = vadd.f32 %v1705, %v1865
    %1867 = vmatprep.mubr.f32.mxu0 0.0
    %1868 = vmatmul.mubr.f32.gmra.mrb[0].mxu0 %v614
    %v1869 = vpop.f32.mrb[0].mxu0
    %v1870 = vadd.f32 %v1709, %v1869
    %v1871 = vpop.f32.mrb[0].mxu0
    %v1872 = vadd.f32 %v1711, %v1871
    %1873 = vmatprep.mubr.f32.mxu0 0.0
    %1874 = vmatmul.mubr.f32.gmra.mrb[0].mxu0 %v617
    %v1875 = vpop.f32.mrb[0].mxu0
    %v1876 = vadd.f32 %v1715, %v1875
    %v1877 = vpop.f32.mrb[0].mxu0
    %v1878 = vadd.f32 %v1717, %v1877
    %1879 = vmatprep.mubr.f32.mxu0 0.0
    %1880 = vmatmul.mubr.f32.gmra.mrb[0].mxu0 %v620
    %v1881 = vpop.f32.mrb[0].mxu0
    %v1882 = vadd.f32 %v1721, %v1881
    %v1883 = vpop.f32.mrb[0].mxu0
    %v1884 = vadd.f32 %v1723, %v1883
    %1885 = vmatprep.mubr.f32.mxu0 0.0
    %1886 = vmatmul.mubr.f32.gmra.mrb[0].mxu0 %v623
    %v1887 = vpop.f32.mrb[0].mxu0
    %v1888 = vadd.f32 %v1727, %v1887
    %v1889 = vpop.f32.mrb[0].mxu0
    %v1890 = vadd.f32 %v1729, %v1889
    %1891 = vmatprep.mubr.f32.mxu0 0.0
    %1892 = vmatmul.mubr.f32.gmra.mrb[0].mxu0 %v626
    %v1893 = vpop.f32.mrb[0].mxu0
    %v1894 = vadd.f32 %v1733, %v1893
    %v1895 = vpop.f32.mrb[0].mxu0
    %v1896 = vadd.f32 %v1735, %v1895
    %1897 = vmatprep.mubr.f32.mxu0 0.0
    %1898 = vmatmul.mubr.f32.gmra.mrb[0].mxu0 %v629
    %v1899 = vpop.f32.mrb[0].mxu0
    %v1900 = vadd.f32 %v1739, %v1899
    %v1901 = vpop.f32.mrb[0].mxu0
    %v1902 = vadd.f32 %v1741, %v1901
    %1903 = vmatprep.mubr.f32.mxu0 0.0
    %1904 = vmatmul.mubr.f32.gmra.mrb[0].mxu0 %v632
    %v1905 = vpop.f32.mrb[0].mxu0
    %v1906 = vadd.f32 %v1745, %v1905
    %v1907 = vpop.f32.mrb[0].mxu0
    %v1908 = vadd.f32 %v1747, %v1907
    %1909 = vmatprep.mubr.f32.mxu0 0.0
    %1910 = vmatmul.mubr.f32.gmra.mrb[0].mxu0 %v635
    %v1911 = vpop.f32.mrb[0].mxu0
    %v1912 = vadd.f32 %v1751, %v1911
    %v1913 = vpop.f32.mrb[0].mxu0
    %v1914 = vadd.f32 %v1753, %v1913
    %1915 = vmatprep.mubr.f32.mxu0 0.0
    %1916 = vmatmul.mubr.f32.gmra.mrb[0].mxu0 %v638
    %v1917 = vpop.f32.mrb[0].mxu0
    %v1918 = vadd.f32 %v1757, %v1917
    %v1919 = vpop.f32.mrb[0].mxu0
    %v1920 = vadd.f32 %v1759, %v1919
    %1921 = vmatprep.mubr.f32.mxu0 0.0
    %1922 = vmatmul.mubr.f32.gmra.mrb[0].mxu0 %v641
    %v1923 = vpop.f32.mrb[0].mxu0
    %v1924 = vadd.f32 %v1763, %v1923
    %v1925 = vpop.f32.mrb[0].mxu0
    %v1926 = vadd.f32 %v1765, %v1925
    %1927 = vmatprep.mubr.f32.mxu0 0.0
    %1928 = vmatmul.mubr.f32.gmra.mrb[0].mxu0 %v644
    %v1929 = vpop.f32.mrb[0].mxu0
    %v1930 = vadd.f32 %v1769, %v1929
    %v1931 = vpop.f32.mrb[0].mxu0
    %v1932 = vadd.f32 %v1771, %v1931
    %1933 = vdwg.mxu0
    %v1934 = vmax.f32 %v1196, 0.0
    %v1935 = vmax.f32 %v1198, 0.0
    %v1936 = vmax.f32 %v1840, 0.0
    %v1937 = vmax.f32 %v1842, 0.0
    %v1938 = vmax.f32 %v1202, 0.0
    %v1939 = vmax.f32 %v1204, 0.0
    %v1940 = vmax.f32 %v1846, 0.0
    %v1941 = vmax.f32 %v1848, 0.0
    %v1942 = vmax.f32 %v1208, 0.0
    %v1943 = vmax.f32 %v1210, 0.0
    %v1944 = vmax.f32 %v1852, 0.0
    %v1945 = vmax.f32 %v1854, 0.0
    %v1946 = vmax.f32 %v1214, 0.0
    %v1947 = vmax.f32 %v1216, 0.0
    %v1948 = vmax.f32 %v1858, 0.0
    %v1949 = vmax.f32 %v1860, 0.0
    %v1950 = vmax.f32 %v1220, 0.0
    %v1951 = vmax.f32 %v1222, 0.0
    %v1952 = vmax.f32 %v1864, 0.0
    %v1953 = vmax.f32 %v1866, 0.0
    %v1954 = vmax.f32 %v1226, 0.0
    %v1955 = vmax.f32 %v1228, 0.0
    %v1956 = vmax.f32 %v1870, 0.0
    %v1957 = vmax.f32 %v1872, 0.0
    %v1958 = vmax.f32 %v1232, 0.0
    %v1959 = vmax.f32 %v1234, 0.0
    %v1960 = vmax.f32 %v1876, 0.0
    %v1961 = vmax.f32 %v1878, 0.0
    %v1962 = vmax.f32 %v1238, 0.0
    %v1963 = vmax.f32 %v1240, 0.0
    %v1964 = vmax.f32 %v1882, 0.0
    %v1965 = vmax.f32 %v1884, 0.0
    %v1966 = vmax.f32 %v1244, 0.0
    %v1967 = vmax.f32 %v1246, 0.0
    %v1968 = vmax.f32 %v1888, 0.0
    %v1969 = vmax.f32 %v1890, 0.0
    %v1970 = vmax.f32 %v1250, 0.0
    %v1971 = vmax.f32 %v1252, 0.0
    %v1972 = vmax.f32 %v1894, 0.0
    %v1973 = vmax.f32 %v1896, 0.0
    %v1974 = vmax.f32 %v1256, 0.0
    %v1975 = vmax.f32 %v1258, 0.0
    %v1976 = vmax.f32 %v1900, 0.0
    %v1977 = vmax.f32 %v1902, 0.0
    %v1978 = vmax.f32 %v1262, 0.0
    %v1979 = vmax.f32 %v1264, 0.0
    %v1980 = vmax.f32 %v1906, 0.0
    %v1981 = vmax.f32 %v1908, 0.0
    %v1982 = vmax.f32 %v1268, 0.0
    %v1983 = vmax.f32 %v1270, 0.0
    %v1984 = vmax.f32 %v1912, 0.0
    %v1985 = vmax.f32 %v1914, 0.0
    %v1986 = vmax.f32 %v1274, 0.0
    %v1987 = vmax.f32 %v1276, 0.0
    %v1988 = vmax.f32 %v1918, 0.0
    %v1989 = vmax.f32 %v1920, 0.0
    %v1990 = vmax.f32 %v1280, 0.0
    %v1991 = vmax.f32 %v1282, 0.0
    %v1992 = vmax.f32 %v1924, 0.0
    %v1993 = vmax.f32 %v1926, 0.0
    %v1994 = vmax.f32 %v1286, 0.0
    %v1995 = vmax.f32 %v1288, 0.0
    %v1996 = vmax.f32 %v1930, 0.0
    %v1997 = vmax.f32 %v1932, 0.0
    %v1998 = vld [vmem:[#allocation6] sm:$0xff]
    %v1999 = vld [vmem:[#allocation6 + $0x8] sm:$0xff]
    %v2000 = vld [vmem:[#allocation6 + $0x10] sm:$0xff]
    %v2001 = vld [vmem:[#allocation6 + $0x18] sm:$0xff]
    %v2002 = vld [vmem:[#allocation6 + $0x20] sm:$0xff]
    %v2003 = vld [vmem:[#allocation6 + $0x28] sm:$0xff]
    %v2004 = vld [vmem:[#allocation6 + $0x30] sm:$0xff]
    %v2005 = vld [vmem:[#allocation6 + $0x38] sm:$0xff]
    %v2006 = vld [vmem:[#allocation6 + $0x40] sm:$0xff]
    %v2007 = vld [vmem:[#allocation6 + $0x48] sm:$0xff]
    %v2008 = vld [vmem:[#allocation6 + $0x50] sm:$0xff]
    %v2009 = vld [vmem:[#allocation6 + $0x58] sm:$0xff]
    %v2010 = vld [vmem:[#allocation6 + $0x60] sm:$0xff]
    %v2011 = vld [vmem:[#allocation6 + $0x68] sm:$0xff]
    %v2012 = vld [vmem:[#allocation6 + $0x70] sm:$0xff]
    %v2013 = vld [vmem:[#allocation6 + $0x78] sm:$0xff]
    %v2014 = vld [vmem:[#allocation6 + $0x80] sm:$0xff]
    %v2015 = vld [vmem:[#allocation6 + $0x88] sm:$0xff]
    %v2016 = vld [vmem:[#allocation6 + $0x90] sm:$0xff]
    %v2017 = vld [vmem:[#allocation6 + $0x98] sm:$0xff]
    %v2018 = vld [vmem:[#allocation6 + $0xa0] sm:$0xff]
    %v2019 = vld [vmem:[#allocation6 + $0xa8] sm:$0xff]
    %v2020 = vld [vmem:[#allocation6 + $0xb0] sm:$0xff]
    %v2021 = vld [vmem:[#allocation6 + $0xb8] sm:$0xff]
    %v2022 = vld [vmem:[#allocation6 + $0xc0] sm:$0xff]
    %v2023 = vld [vmem:[#allocation6 + $0xc8] sm:$0xff]
    %v2024 = vld [vmem:[#allocation6 + $0xd0] sm:$0xff]
    %v2025 = vld [vmem:[#allocation6 + $0xd8] sm:$0xff]
    %v2026 = vld [vmem:[#allocation6 + $0xe0] sm:$0xff]
    %v2027 = vld [vmem:[#allocation6 + $0xe8] sm:$0xff]
    %v2028 = vld [vmem:[#allocation6 + $0xf0] sm:$0xff]
    %v2029 = vld [vmem:[#allocation6 + $0xf8] sm:$0xff]
    %v2030 = vld [vmem:[#allocation6 + $0x100] sm:$0xff]
    %v2031 = vld [vmem:[#allocation6 + $0x108] sm:$0xff]
    %v2032 = vld [vmem:[#allocation6 + $0x110] sm:$0xff]
    %v2033 = vld [vmem:[#allocation6 + $0x118] sm:$0xff]
    %v2034 = vld [vmem:[#allocation6 + $0x120] sm:$0xff]
    %v2035 = vld [vmem:[#allocation6 + $0x128] sm:$0xff]
    %v2036 = vld [vmem:[#allocation6 + $0x130] sm:$0xff]
    %v2037 = vld [vmem:[#allocation6 + $0x138] sm:$0xff]
    %v2038 = vld [vmem:[#allocation6 + $0x140] sm:$0xff]
    %v2039 = vld [vmem:[#allocation6 + $0x148] sm:$0xff]
    %v2040 = vld [vmem:[#allocation6 + $0x150] sm:$0xff]
    %v2041 = vld [vmem:[#allocation6 + $0x158] sm:$0xff]
    %v2042 = vld [vmem:[#allocation6 + $0x160] sm:$0xff]
    %v2043 = vld [vmem:[#allocation6 + $0x168] sm:$0xff]
    %v2044 = vld [vmem:[#allocation6 + $0x170] sm:$0xff]
    %v2045 = vld [vmem:[#allocation6 + $0x178] sm:$0xff]
    %v2046 = vld [vmem:[#allocation6 + $0x180] sm:$0xff]
    %v2047 = vld [vmem:[#allocation6 + $0x188] sm:$0xff]
    %v2048 = vld [vmem:[#allocation6 + $0x190] sm:$0xff]
    %v2049 = vld [vmem:[#allocation6 + $0x198] sm:$0xff]
    %v2050 = vld [vmem:[#allocation6 + $0x1a0] sm:$0xff]
    %v2051 = vld [vmem:[#allocation6 + $0x1a8] sm:$0xff]
    %v2052 = vld [vmem:[#allocation6 + $0x1b0] sm:$0xff]
    %v2053 = vld [vmem:[#allocation6 + $0x1b8] sm:$0xff]
    %v2054 = vld [vmem:[#allocation6 + $0x1c0] sm:$0xff]
    %v2055 = vld [vmem:[#allocation6 + $0x1c8] sm:$0xff]
    %v2056 = vld [vmem:[#allocation6 + $0x1d0] sm:$0xff]
    %v2057 = vld [vmem:[#allocation6 + $0x1d8] sm:$0xff]
    %v2058 = vld [vmem:[#allocation6 + $0x1e0] sm:$0xff]
    %v2059 = vld [vmem:[#allocation6 + $0x1e8] sm:$0xff]
    %v2060 = vld [vmem:[#allocation6 + $0x1f0] sm:$0xff]
    %v2061 = vld [vmem:[#allocation6 + $0x1f8] sm:$0xff]
    %v2062 = vld [vmem:[#allocation7] sm:$0x1]
    %v2064 = vlaneseq
    %v2065 = vshrl.u32 %v2064, 7
    %v2066 = vsub.s32 0, %v2065
    %v2067 = vrot.slane %v2062, %v2066
    %2069 = vmatprep.subr.mxu0 0.0
    %2070 = vmatpush1.msra.mxu0 %v1998
    %2071 = vmatprep.subr.mxu0 0.0
    %2072 = vmatpush1.msra.mxu0 %v1999
    %2073 = vmatprep.subr.mxu0 0.0
    %2074 = vmatpush1.msra.mxu0 %v2000
    %2075 = vmatprep.subr.mxu0 0.0
    %2076 = vmatpush1.msra.mxu0 %v2001
    %2077 = vmatprep.subr.mxu0 0.0
    %2078 = vmatpush1.msra.mxu0 %v2002
    %2079 = vmatprep.subr.mxu0 0.0
    %2080 = vmatpush1.msra.mxu0 %v2003
    %2081 = vmatprep.subr.mxu0 0.0
    %2082 = vmatpush1.msra.mxu0 %v2004
    %2083 = vmatprep.subr.mxu0 0.0
    %2084 = vmatpush1.msra.mxu0 %v2005
    %2085 = vmatprep.subr.mxu0 0.0
    %2086 = vmatpush1.msra.mxu0 %v2006
    %2087 = vmatprep.subr.mxu0 0.0
    %2088 = vmatpush1.msra.mxu0 %v2007
    %2089 = vmatprep.subr.mxu0 0.0
    %2090 = vmatpush1.msra.mxu0 %v2008
    %2091 = vmatprep.subr.mxu0 0.0
    %2092 = vmatpush1.msra.mxu0 %v2009
    %2093 = vmatprep.subr.mxu0 0.0
    %2094 = vmatpush1.msra.mxu0 %v2010
    %2095 = vmatprep.subr.mxu0 0.0
    %2096 = vmatpush1.msra.mxu0 %v2011
    %2097 = vmatprep.subr.mxu0 0.0
    %2098 = vmatpush1.msra.mxu0 %v2012
    %2099 = vmatprep.subr.mxu0 0.0
    %2100 = vmatpush1.msra.mxu0 %v2013
    %2101 = vmatprep.subr.mxu0 0.0
    %2102 = vmatpush1.msra.mxu0 %v2014
    %2103 = vmatprep.subr.mxu0 0.0
    %2104 = vmatpush1.msra.mxu0 %v2015
    %2105 = vmatprep.subr.mxu0 0.0
    %2106 = vmatpush1.msra.mxu0 %v2016
    %2107 = vmatprep.subr.mxu0 0.0
    %2108 = vmatpush1.msra.mxu0 %v2017
    %2109 = vmatprep.subr.mxu0 0.0
    %2110 = vmatpush1.msra.mxu0 %v2018
    %2111 = vmatprep.subr.mxu0 0.0
    %2112 = vmatpush1.msra.mxu0 %v2019
    %2113 = vmatprep.subr.mxu0 0.0
    %2114 = vmatpush1.msra.mxu0 %v2020
    %2115 = vmatprep.subr.mxu0 0.0
    %2116 = vmatpush1.msra.mxu0 %v2021
    %2117 = vmatprep.subr.mxu0 0.0
    %2118 = vmatpush1.msra.mxu0 %v2022
    %2119 = vmatprep.subr.mxu0 0.0
    %2120 = vmatpush1.msra.mxu0 %v2023
    %2121 = vmatprep.subr.mxu0 0.0
    %2122 = vmatpush1.msra.mxu0 %v2024
    %2123 = vmatprep.subr.mxu0 0.0
    %2124 = vmatpush1.msra.mxu0 %v2025
    %2125 = vmatprep.subr.mxu0 0.0
    %2126 = vmatpush1.msra.mxu0 %v2026
    %2127 = vmatprep.subr.mxu0 0.0
    %2128 = vmatpush1.msra.mxu0 %v2027
    %2129 = vmatprep.subr.mxu0 0.0
    %2130 = vmatpush1.msra.mxu0 %v2028
    %2131 = vmatprep.subr.mxu0 0.0
    %2132 = vmatpush1.msra.mxu0 %v2029
    %2133 = vmatprep.mubr.f32.mxu0 %v1935
    %2134 = vmatmul.mubr.f32.gmra.mrb[0].mxu0 %v1934
    %v2135 = vpop.f32.mrb[0].mxu0
    %v2136 = vadd.f32 %v2067, %v2135
    %v2137 = vpop.f32.mrb[0].mxu0
    %2138 = vmatprep.mubr.f32.mxu0 %v1939
    %2139 = vmatmul.mubr.f32.gmra.mrb[0].mxu0 %v1938
    %v2140 = vpop.f32.mrb[0].mxu0
    %v2141 = vadd.f32 %v2067, %v2140
    %v2142 = vpop.f32.mrb[0].mxu0
    %2143 = vmatprep.mubr.f32.mxu0 %v1943
    %2144 = vmatmul.mubr.f32.gmra.mrb[0].mxu0 %v1942
    %v2145 = vpop.f32.mrb[0].mxu0
    %v2146 = vadd.f32 %v2067, %v2145
    %v2147 = vpop.f32.mrb[0].mxu0
    %2148 = vmatprep.mubr.f32.mxu0 %v1947
    %2149 = vmatmul.mubr.f32.gmra.mrb[0].mxu0 %v1946
    %v2150 = vpop.f32.mrb[0].mxu0
    %v2151 = vadd.f32 %v2067, %v2150
    %v2152 = vpop.f32.mrb[0].mxu0
    %2153 = vmatprep.mubr.f32.mxu0 %v1951
    %2154 = vmatmul.mubr.f32.gmra.mrb[0].mxu0 %v1950
    %v2155 = vpop.f32.mrb[0].mxu0
    %v2156 = vadd.f32 %v2067, %v2155
    %v2157 = vpop.f32.mrb[0].mxu0
    %2158 = vmatprep.mubr.f32.mxu0 %v1955
    %2159 = vmatmul.mubr.f32.gmra.mrb[0].mxu0 %v1954
    %v2160 = vpop.f32.mrb[0].mxu0
    %v2161 = vadd.f32 %v2067, %v2160
    %v2162 = vpop.f32.mrb[0].mxu0
    %2163 = vmatprep.mubr.f32.mxu0 %v1959
    %2164 = vmatmul.mubr.f32.gmra.mrb[0].mxu0 %v1958
    %v2165 = vpop.f32.mrb[0].mxu0
    %v2166 = vadd.f32 %v2067, %v2165
    %v2167 = vpop.f32.mrb[0].mxu0
    %2168 = vmatprep.mubr.f32.mxu0 %v1963
    %2169 = vmatmul.mubr.f32.gmra.mrb[0].mxu0 %v1962
    %v2170 = vpop.f32.mrb[0].mxu0
    %v2171 = vadd.f32 %v2067, %v2170
    %v2172 = vpop.f32.mrb[0].mxu0
    %2173 = vmatprep.mubr.f32.mxu0 %v1967
    %2174 = vmatmul.mubr.f32.gmra.mrb[0].mxu0 %v1966
    %v2175 = vpop.f32.mrb[0].mxu0
    %v2176 = vadd.f32 %v2067, %v2175
    %v2177 = vpop.f32.mrb[0].mxu0
    %2178 = vmatprep.mubr.f32.mxu0 %v1971
    %2179 = vmatmul.mubr.f32.gmra.mrb[0].mxu0 %v1970
    %v2180 = vpop.f32.mrb[0].mxu0
    %v2181 = vadd.f32 %v2067, %v2180
    %v2182 = vpop.f32.mrb[0].mxu0
    %2183 = vmatprep.mubr.f32.mxu0 %v1975
    %2184 = vmatmul.mubr.f32.gmra.mrb[0].mxu0 %v1974
    %v2185 = vpop.f32.mrb[0].mxu0
    %v2186 = vadd.f32 %v2067, %v2185
    %v2187 = vpop.f32.mrb[0].mxu0
    %2188 = vmatprep.mubr.f32.mxu0 %v1979
    %2189 = vmatmul.mubr.f32.gmra.mrb[0].mxu0 %v1978
    %v2190 = vpop.f32.mrb[0].mxu0
    %v2191 = vadd.f32 %v2067, %v2190
    %v2192 = vpop.f32.mrb[0].mxu0
    %2193 = vmatprep.mubr.f32.mxu0 %v1983
    %2194 = vmatmul.mubr.f32.gmra.mrb[0].mxu0 %v1982
    %v2195 = vpop.f32.mrb[0].mxu0
    %v2196 = vadd.f32 %v2067, %v2195
    %v2197 = vpop.f32.mrb[0].mxu0
    %2198 = vmatprep.mubr.f32.mxu0 %v1987
    %2199 = vmatmul.mubr.f32.gmra.mrb[0].mxu0 %v1986
    %v2200 = vpop.f32.mrb[0].mxu0
    %v2201 = vadd.f32 %v2067, %v2200
    %v2202 = vpop.f32.mrb[0].mxu0
    %2203 = vmatprep.mubr.f32.mxu0 %v1991
    %2204 = vmatmul.mubr.f32.gmra.mrb[0].mxu0 %v1990
    %v2205 = vpop.f32.mrb[0].mxu0
    %v2206 = vadd.f32 %v2067, %v2205
    %v2207 = vpop.f32.mrb[0].mxu0
    %2208 = vmatprep.mubr.f32.mxu0 %v1995
    %2209 = vmatmul.mubr.f32.gmra.mrb[0].mxu0 %v1994
    %v2210 = vpop.f32.mrb[0].mxu0
    %v2211 = vadd.f32 %v2067, %v2210
    %v2212 = vpop.f32.mrb[0].mxu0
    %2213 = vdwg.mxu0
    %2214 = vmatprep.subr.mxu0 0.0
    %2215 = vmatpush1.msra.mxu0 %v2030
    %2216 = vmatprep.subr.mxu0 0.0
    %2217 = vmatpush1.msra.mxu0 %v2031
    %2218 = vmatprep.subr.mxu0 0.0
    %2219 = vmatpush1.msra.mxu0 %v2032
    %2220 = vmatprep.subr.mxu0 0.0
    %2221 = vmatpush1.msra.mxu0 %v2033
    %2222 = vmatprep.subr.mxu0 0.0
    %2223 = vmatpush1.msra.mxu0 %v2034
    %2224 = vmatprep.subr.mxu0 0.0
    %2225 = vmatpush1.msra.mxu0 %v2035
    %2226 = vmatprep.subr.mxu0 0.0
    %2227 = vmatpush1.msra.mxu0 %v2036
    %2228 = vmatprep.subr.mxu0 0.0
    %2229 = vmatpush1.msra.mxu0 %v2037
    %2230 = vmatprep.subr.mxu0 0.0
    %2231 = vmatpush1.msra.mxu0 %v2038
    %2232 = vmatprep.subr.mxu0 0.0
    %2233 = vmatpush1.msra.mxu0 %v2039
    %2234 = vmatprep.subr.mxu0 0.0
    %2235 = vmatpush1.msra.mxu0 %v2040
    %2236 = vmatprep.subr.mxu0 0.0
    %2237 = vmatpush1.msra.mxu0 %v2041
    %2238 = vmatprep.subr.mxu0 0.0
    %2239 = vmatpush1.msra.mxu0 %v2042
    %2240 = vmatprep.subr.mxu0 0.0
    %2241 = vmatpush1.msra.mxu0 %v2043
    %2242 = vmatprep.subr.mxu0 0.0
    %2243 = vmatpush1.msra.mxu0 %v2044
    %2244 = vmatprep.subr.mxu0 0.0
    %2245 = vmatpush1.msra.mxu0 %v2045
    %2246 = vmatprep.subr.mxu0 0.0
    %2247 = vmatpush1.msra.mxu0 %v2046
    %2248 = vmatprep.subr.mxu0 0.0
    %2249 = vmatpush1.msra.mxu0 %v2047
    %2250 = vmatprep.subr.mxu0 0.0
    %2251 = vmatpush1.msra.mxu0 %v2048
    %2252 = vmatprep.subr.mxu0 0.0
    %2253 = vmatpush1.msra.mxu0 %v2049
    %2254 = vmatprep.subr.mxu0 0.0
    %2255 = vmatpush1.msra.mxu0 %v2050
    %2256 = vmatprep.subr.mxu0 0.0
    %2257 = vmatpush1.msra.mxu0 %v2051
    %2258 = vmatprep.subr.mxu0 0.0
    %2259 = vmatpush1.msra.mxu0 %v2052
    %2260 = vmatprep.subr.mxu0 0.0
    %2261 = vmatpush1.msra.mxu0 %v2053
    %2262 = vmatprep.subr.mxu0 0.0
    %2263 = vmatpush1.msra.mxu0 %v2054
    %2264 = vmatprep.subr.mxu0 0.0
    %2265 = vmatpush1.msra.mxu0 %v2055
    %2266 = vmatprep.subr.mxu0 0.0
    %2267 = vmatpush1.msra.mxu0 %v2056
    %2268 = vmatprep.subr.mxu0 0.0
    %2269 = vmatpush1.msra.mxu0 %v2057
    %2270 = vmatprep.subr.mxu0 0.0
    %2271 = vmatpush1.msra.mxu0 %v2058
    %2272 = vmatprep.subr.mxu0 0.0
    %2273 = vmatpush1.msra.mxu0 %v2059
    %2274 = vmatprep.subr.mxu0 0.0
    %2275 = vmatpush1.msra.mxu0 %v2060
    %2276 = vmatprep.subr.mxu0 0.0
    %2277 = vmatpush1.msra.mxu0 %v2061
    %2278 = vmatprep.mubr.f32.mxu0 %v1937
    %2279 = vmatmul.mubr.f32.gmra.mrb[0].mxu0 %v1936
    %v2280 = vpop.f32.mrb[0].mxu0
    %v2281 = vadd.f32 %v2136, %v2280
    %v2282 = vpop.f32.mrb[0].mxu0
    %2283 = vmatprep.mubr.f32.mxu0 %v1941
    %2284 = vmatmul.mubr.f32.gmra.mrb[0].mxu0 %v1940
    %v2285 = vpop.f32.mrb[0].mxu0
    %v2286 = vadd.f32 %v2141, %v2285
    %v2287 = vpop.f32.mrb[0].mxu0
    %2288 = vmatprep.mubr.f32.mxu0 %v1945
    %2289 = vmatmul.mubr.f32.gmra.mrb[0].mxu0 %v1944
    %v2290 = vpop.f32.mrb[0].mxu0
    %v2291 = vadd.f32 %v2146, %v2290
    %v2292 = vpop.f32.mrb[0].mxu0
    %2293 = vmatprep.mubr.f32.mxu0 %v1949
    %2294 = vmatmul.mubr.f32.gmra.mrb[0].mxu0 %v1948
    %v2295 = vpop.f32.mrb[0].mxu0
    %v2296 = vadd.f32 %v2151, %v2295
    %v2297 = vpop.f32.mrb[0].mxu0
    %2298 = vmatprep.mubr.f32.mxu0 %v1953
    %2299 = vmatmul.mubr.f32.gmra.mrb[0].mxu0 %v1952
    %v2300 = vpop.f32.mrb[0].mxu0
    %v2301 = vadd.f32 %v2156, %v2300
    %v2302 = vpop.f32.mrb[0].mxu0
    %2303 = vmatprep.mubr.f32.mxu0 %v1957
    %2304 = vmatmul.mubr.f32.gmra.mrb[0].mxu0 %v1956
    %v2305 = vpop.f32.mrb[0].mxu0
    %v2306 = vadd.f32 %v2161, %v2305
    %v2307 = vpop.f32.mrb[0].mxu0
    %2308 = vmatprep.mubr.f32.mxu0 %v1961
    %2309 = vmatmul.mubr.f32.gmra.mrb[0].mxu0 %v1960
    %v2310 = vpop.f32.mrb[0].mxu0
    %v2311 = vadd.f32 %v2166, %v2310
    %v2312 = vpop.f32.mrb[0].mxu0
    %2313 = vmatprep.mubr.f32.mxu0 %v1965
    %2314 = vmatmul.mubr.f32.gmra.mrb[0].mxu0 %v1964
    %v2315 = vpop.f32.mrb[0].mxu0
    %v2316 = vadd.f32 %v2171, %v2315
    %v2317 = vpop.f32.mrb[0].mxu0
    %2318 = vmatprep.mubr.f32.mxu0 %v1969
    %2319 = vmatmul.mubr.f32.gmra.mrb[0].mxu0 %v1968
    %v2320 = vpop.f32.mrb[0].mxu0
    %v2321 = vadd.f32 %v2176, %v2320
    %v2322 = vpop.f32.mrb[0].mxu0
    %2323 = vmatprep.mubr.f32.mxu0 %v1973
    %2324 = vmatmul.mubr.f32.gmra.mrb[0].mxu0 %v1972
    %v2325 = vpop.f32.mrb[0].mxu0
    %v2326 = vadd.f32 %v2181, %v2325
    %v2327 = vpop.f32.mrb[0].mxu0
    %2328 = vmatprep.mubr.f32.mxu0 %v1977
    %2329 = vmatmul.mubr.f32.gmra.mrb[0].mxu0 %v1976
    %v2330 = vpop.f32.mrb[0].mxu0
    %v2331 = vadd.f32 %v2186, %v2330
    %v2332 = vpop.f32.mrb[0].mxu0
    %2333 = vmatprep.mubr.f32.mxu0 %v1981
    %2334 = vmatmul.mubr.f32.gmra.mrb[0].mxu0 %v1980
    %v2335 = vpop.f32.mrb[0].mxu0
    %v2336 = vadd.f32 %v2191, %v2335
    %v2337 = vpop.f32.mrb[0].mxu0
    %2338 = vmatprep.mubr.f32.mxu0 %v1985
    %2339 = vmatmul.mubr.f32.gmra.mrb[0].mxu0 %v1984
    %v2340 = vpop.f32.mrb[0].mxu0
    %v2341 = vadd.f32 %v2196, %v2340
    %v2342 = vpop.f32.mrb[0].mxu0
    %2343 = vmatprep.mubr.f32.mxu0 %v1989
    %2344 = vmatmul.mubr.f32.gmra.mrb[0].mxu0 %v1988
    %v2345 = vpop.f32.mrb[0].mxu0
    %v2346 = vadd.f32 %v2201, %v2345
    %v2347 = vpop.f32.mrb[0].mxu0
    %2348 = vmatprep.mubr.f32.mxu0 %v1993
    %2349 = vmatmul.mubr.f32.gmra.mrb[0].mxu0 %v1992
    %v2350 = vpop.f32.mrb[0].mxu0
    %v2351 = vadd.f32 %v2206, %v2350
    %v2352 = vpop.f32.mrb[0].mxu0
    %2353 = vmatprep.mubr.f32.mxu0 %v1997
    %2354 = vmatmul.mubr.f32.gmra.mrb[0].mxu0 %v1996
    %v2355 = vpop.f32.mrb[0].mxu0
    %v2356 = vadd.f32 %v2211, %v2355
    %v2357 = vpop.f32.mrb[0].mxu0
    %2358 = vdwg.mxu0
    %2359 = vst [vmem:[%s5] sm:$0xff] %v2281
    %2360 = vst [vmem:[%s5 + $0x8] sm:$0xff] %v2286
    %2361 = vst [vmem:[%s5 + $0x10] sm:$0xff] %v2291
    %2362 = vst [vmem:[%s5 + $0x18] sm:$0xff] %v2296
    %2363 = vst [vmem:[%s5 + $0x20] sm:$0xff] %v2301
    %2364 = vst [vmem:[%s5 + $0x28] sm:$0xff] %v2306
    %2365 = vst [vmem:[%s5 + $0x30] sm:$0xff] %v2311
    %2366 = vst [vmem:[%s5 + $0x38] sm:$0xff] %v2316
    %2367 = vst [vmem:[%s5 + $0x40] sm:$0xff] %v2321
    %2368 = vst [vmem:[%s5 + $0x48] sm:$0xff] %v2326
    %2369 = vst [vmem:[%s5 + $0x50] sm:$0xff] %v2331
    %2370 = vst [vmem:[%s5 + $0x58] sm:$0xff] %v2336
    %2371 = vst [vmem:[%s5 + $0x60] sm:$0xff] %v2341
    %2372 = vst [vmem:[%s5 + $0x68] sm:$0xff] %v2346
    %2373 = vst [vmem:[%s5 + $0x70] sm:$0xff] %v2351
    %2374 = vst [vmem:[%s5 + $0x78] sm:$0xff] %v2356
    // Predicated region
    $region38: #{encoder_forward.1} parent=1 // pred_check
      _
    $region39: #{encoder_forward.1} parent=1 // pred_check_branch
      %2376 = sbr.rel (0) target = $region41
    $region40: #{encoder_forward.1} parent=1 // pred_region
      _
    $region41: #{encoder_forward.1} parent=1 // pred_fallthru
      _
    // Predicated region
    $region42: #{encoder_forward.1} parent=1 // pred_check
      _
    $region43: #{encoder_forward.1} parent=1 // pred_check_branch
      %2378 = sbr.rel (0) target = $region45
    $region44: #{encoder_forward.1} parent=1 // pred_region
      _
    $region45: #{encoder_forward.1} parent=1 // pred_fallthru
      _
    %2379 = vsyncpa [#allocation3], 1
    %2380 = vsyncpa [#allocation5], 1
    %2381 = vsyncpa [#allocation8], 1

</llo_original>
